<compile_context>
chip_gen: v5e
topology: v5e:2x2
jax: 0.10.0
libtpu: 0.0.40
codegen_flags: <defaults>
</compile_context>

<pallas_src>
import functools

import jax
import jax.numpy as jnp
from jax.experimental import pallas as pl
from jax.experimental.pallas import tpu as pltpu


# ----------------------------- Pallas kernels ------------------------------

def _layernorm_f32(x, g, b):
    mean = jnp.mean(x, axis=-1, keepdims=True)
    var = jnp.mean((x - mean) ** 2, axis=-1, keepdims=True)
    return (x - mean) * jax.lax.rsqrt(var + 1e-5) * g + b


def _bf16_dot(a, b):
    return jnp.dot(a.astype(jnp.bfloat16), b.astype(jnp.bfloat16),
                   preferred_element_type=jnp.float32)


def _block_kernel(h_ref, ln1g_ref, ln1b_ref, wqkv_ref, bqkv_ref,
                  wo_ref, bo_ref, ln2g_ref, ln2b_ref,
                  w1_ref, b1_ref, w2_ref, b2_ref, o_ref,
                  *, num_heads, scale):
    """One full transformer block for one batch element, fully fused in VMEM."""
    h = h_ref[0]                                   # (T, D) f32
    t, d = h.shape
    dh = d // num_heads

    # ---- LN1 + fused QKV projection (single (D, 3D) matmul) ----
    x2 = _layernorm_f32(h, ln1g_ref[...], ln1b_ref[...])
    qkv = _bf16_dot(x2, wqkv_ref[...]) + bqkv_ref[...]        # (T, 3D) f32

    # ---- causal multi-head attention; heads are contiguous Dh slices of D ----
    row = jax.lax.broadcasted_iota(jnp.int32, (t, t), 0)
    col = jax.lax.broadcasted_iota(jnp.int32, (t, t), 1)
    causal = col <= row
    head_outs = []
    for hh in range(num_heads):                               # static unroll
        qh = qkv[:, hh * dh:(hh + 1) * dh]
        kh = qkv[:, d + hh * dh: d + (hh + 1) * dh]
        vh = qkv[:, 2 * d + hh * dh: 2 * d + (hh + 1) * dh]
        # q @ k^T without materializing a transpose (contract last dims).
        s = jax.lax.dot_general(
            qh.astype(jnp.bfloat16), kh.astype(jnp.bfloat16),
            dimension_numbers=(((1,), (1,)), ((), ())),
            preferred_element_type=jnp.float32) * scale
        s = jnp.where(causal, s, -1e30)                       # finite mask
        s = s - jnp.max(s, axis=-1, keepdims=True)
        p = jnp.exp(s)
        p = p * pl.reciprocal(jnp.sum(p, axis=-1, keepdims=True), approx=True)
        head_outs.append(_bf16_dot(p, vh))                    # (T, Dh)
    attn = jnp.concatenate(head_outs, axis=-1)                # (T, D)

    # ---- output projection + residual ----
    h = h + _bf16_dot(attn, wo_ref[...]) + bo_ref[...]

    # ---- LN2 + MLP (tanh-GELU) + residual ----
    x3 = _layernorm_f32(h, ln2g_ref[...], ln2b_ref[...])
    m = _bf16_dot(x3, w1_ref[...]) + b1_ref[...]
    c = 0.7978845608028654  # sqrt(2/pi)
    m = 0.5 * m * (1.0 + jnp.tanh(c * (m + 0.044715 * m * m * m)))
    h = h + _bf16_dot(m, w2_ref[...]) + b2_ref[...]

    o_ref[0] = h


def _lm_head_kernel(x_ref, g_ref, b_ref, emb_ref, o_ref):
    """Final LayerNorm fused with the weight-tied LM head (contract along D)."""
    xn = _layernorm_f32(x_ref[...], g_ref[...], b_ref[...])   # (tm, D)
    # logits_tile = xn @ emb_tile^T, expressed as dot_general (no HBM transpose)
    o_ref[...] = jax.lax.dot_general(
        xn.astype(jnp.bfloat16), emb_ref[...].astype(jnp.bfloat16),
        dimension_numbers=(((1,), (1,)), ((), ())),
        preferred_element_type=jnp.float32)


# ----------------------------- kernel wrappers ------------------------------

_VMEM_LIMIT = 32 * 1024 * 1024  # safe on v5e/v6e/v7x


def transformer_block(h, p, num_heads):
    """h: (B, T, D) f32 -> (B, T, D) f32. One pallas_call per block."""
    bsz, t, d = h.shape
    d3 = 3 * d
    hidden = p["w1"].shape[1]
    dh = d // num_heads
    scale = 1.0 / (dh ** 0.5)

    def full(r, c):
        return pl.BlockSpec((r, c), lambda b: (0, 0))

    act_spec = pl.BlockSpec((1, t, d), lambda b: (b, 0, 0))

    return pl.pallas_call(
        functools.partial(_block_kernel, num_heads=num_heads, scale=scale),
        out_shape=jax.ShapeDtypeStruct((bsz, t, d), jnp.float32),
        grid=(bsz,),
        in_specs=[
            act_spec,
            full(1, d), full(1, d),            # ln1 gamma/beta
            full(d, d3), full(1, d3),          # fused wqkv / bqkv
            full(d, d), full(1, d),            # wo / bo
            full(1, d), full(1, d),            # ln2 gamma/beta
            full(d, hidden), full(1, hidden),  # w1 / b1
            full(hidden, d), full(1, d),       # w2 / b2
        ],
        out_specs=act_spec,
        compiler_params=pltpu.CompilerParams(
            dimension_semantics=("parallel",),
            vmem_limit_bytes=_VMEM_LIMIT),
    )(h,
      p["ln1_g"], p["ln1_b"],
      p["wqkv"], p["bqkv"],
      p["wo"], p["bo"],
      p["ln2_g"], p["ln2_b"],
      p["w1"], p["b1"],
      p["w2"], p["b2"])


def lm_head(x, g, b, tok_emb):
    """x: (M, D); tok_emb: (V, D). Returns LN(x) @ tok_emb.T as (M, V)."""
    m, d = x.shape
    v = tok_emb.shape[0]
    tm = m if m <= 256 else 256
    assert m % tm == 0, (m, tm)
    tv = 128 if v % 128 == 0 else v
    assert v % tv == 0, (v, tv)

    return pl.pallas_call(
        _lm_head_kernel,
        out_shape=jax.ShapeDtypeStruct((m, v), jnp.float32),
        grid=(pl.cdiv(m, tm), pl.cdiv(v, tv)),
        in_specs=[
            pl.BlockSpec((tm, d), lambda i, j: (i, 0)),
            pl.BlockSpec((1, d), lambda i, j: (0, 0)),
            pl.BlockSpec((1, d), lambda i, j: (0, 0)),
            pl.BlockSpec((tv, d), lambda i, j: (j, 0)),
        ],
        out_specs=pl.BlockSpec((tm, tv), lambda i, j: (i, j)),
        compiler_params=pltpu.CompilerParams(
            dimension_semantics=("parallel", "parallel"),
            vmem_limit_bytes=_VMEM_LIMIT),
    )(x, g, b, tok_emb)


# ------------------------------- model glue --------------------------------

def init_params(key, vocab, d, ctx, scaling_factor, num_layers):
    std = 0.02
    hidden = scaling_factor * d
    keys = jax.random.split(key, 2 + num_layers)
    params = {
        "tok_emb": jax.random.normal(keys[0], (vocab, d), jnp.float32) * std,
        "pos_emb": jax.random.normal(keys[1], (ctx, d), jnp.float32) * std,
        "lnf_g": jnp.ones((1, d), jnp.float32),
        "lnf_b": jnp.zeros((1, d), jnp.float32),
        "blocks": [],
    }
    for layer in range(num_layers):
        bk = jax.random.split(keys[2 + layer], 6)
        wq = jax.random.normal(bk[0], (d, d), jnp.float32) * std
        wk = jax.random.normal(bk[1], (d, d), jnp.float32) * std
        wv = jax.random.normal(bk[2], (d, d), jnp.float32) * std
        params["blocks"].append({
            "ln1_g": jnp.ones((1, d), jnp.float32),
            "ln1_b": jnp.zeros((1, d), jnp.float32),
            # fused QKV weight/bias: (D, 3D) / (1, 3D)
            "wqkv": jnp.concatenate([wq, wk, wv], axis=1),
            "bqkv": jnp.zeros((1, 3 * d), jnp.float32),
            "wo": jax.random.normal(bk[3], (d, d), jnp.float32) * std,
            "bo": jnp.zeros((1, d), jnp.float32),
            "ln2_g": jnp.ones((1, d), jnp.float32),
            "ln2_b": jnp.zeros((1, d), jnp.float32),
            "w1": jax.random.normal(bk[4], (d, hidden), jnp.float32) * std,
            "b1": jnp.zeros((1, hidden), jnp.float32),
            "w2": jax.random.normal(bk[5], (hidden, d), jnp.float32) * std,
            "b2": jnp.zeros((1, d), jnp.float32),
        })
    return params


def tamil_gpt_forward(params, tokens, num_heads):
    bsz, t = tokens.shape
    d = params["tok_emb"].shape[1]
    vocab = params["tok_emb"].shape[0]

    tok_emb = jnp.take(params["tok_emb"], tokens, axis=0)   # (B, T, D)
    pos_emb = params["pos_emb"][:t]                         # (T, D)
    h = tok_emb + pos_emb[None]
    # embedding dropout: identity (eval / dropout=0.0)

    for blk in params["blocks"]:
        h = transformer_block(h, blk, num_heads)

    # final LayerNorm fused with the weight-tied LM head
    logits = lm_head(h.reshape(bsz * t, d), params["lnf_g"], params["lnf_b"],
                     params["tok_emb"])
    return logits.reshape(bsz, t, vocab)


# ---------------------------------- main ------------------------------------

if __name__ == "__main__":
    vocab_size = 256
    embedding_dimension = 64
    context_length = 16
    num_heads = 4
    scaling_factor = 4
    num_layers = 2

    key = jax.random.PRNGKey(0)
    pkey, xkey = jax.random.split(key)
    params = init_params(pkey, vocab_size, embedding_dimension,
                         context_length, scaling_factor, num_layers)

    batch = 2
    tokens = jax.random.randint(xkey, (batch, context_length), 0, vocab_size,
                                dtype=jnp.int32)

    logits = jax.jit(functools.partial(tamil_gpt_forward, num_heads=num_heads))(
        params, tokens)
    logits = jax.block_until_ready(logits)

    assert logits.shape == (batch, context_length, vocab_size), logits.shape
    assert logits.dtype == jnp.float32
    assert bool(jnp.all(jnp.isfinite(logits)))
    print("KERNEL_OK")
</pallas_src>

<mosaic_0001>
module attributes {stable_mosaic.version = 11 : i64} {
  func.func @_lm_head_kernel(%arg0: i32, %arg1: i32, %arg2: memref<32x64xf32, #tpu.memory_space<vmem>>, %arg3: memref<1x64xf32, #tpu.memory_space<vmem>>, %arg4: memref<1x64xf32, #tpu.memory_space<vmem>>, %arg5: memref<128x64xf32, #tpu.memory_space<vmem>>, %arg6: memref<32x128xf32, #tpu.memory_space<vmem>>) attributes {dimension_semantics = [#tpu.dimension_semantics<parallel>, #tpu.dimension_semantics<parallel>], iteration_bounds = array<i64: 1, 2>, scalar_prefetch = 0 : i64, scratch_operands = 0 : i64, tpu.core_type = #tpu.core_type<tc>, window_params = [{transform_indices = @transform_0, window_bounds = array<i64: 32, 64>}, {pipeline_mode = #tpu.pipeline_mode<synchronous>, transform_indices = @transform_1, window_bounds = array<i64: 1, 64>}, {pipeline_mode = #tpu.pipeline_mode<synchronous>, transform_indices = @transform_2, window_bounds = array<i64: 1, 64>}, {transform_indices = @transform_3, window_bounds = array<i64: 128, 64>}, {transform_indices = @transform_4, window_bounds = array<i64: 32, 128>}]} {
    %c0 = arith.constant 0 : index
    %c0_0 = arith.constant 0 : index
    %0 = vector.load %arg2[%c0, %c0_0] : memref<32x64xf32, #tpu.memory_space<vmem>>, vector<32x64xf32>
    %c0_1 = arith.constant 0 : index
    %c0_2 = arith.constant 0 : index
    %1 = vector.load %arg3[%c0_1, %c0_2] : memref<1x64xf32, #tpu.memory_space<vmem>>, vector<1x64xf32>
    %c0_3 = arith.constant 0 : index
    %c0_4 = arith.constant 0 : index
    %2 = vector.load %arg4[%c0_3, %c0_4] : memref<1x64xf32, #tpu.memory_space<vmem>>, vector<1x64xf32>
    %cst = arith.constant dense<0.000000e+00> : vector<32xf32>
    %3 = vector.multi_reduction <add>, %0, %cst [1] : vector<32x64xf32> to vector<32xf32>
    %4 = vector.shape_cast %3 : vector<32xf32> to vector<32x1xf32>
    %cst_5 = arith.constant 6.400000e+01 : f32
    %5 = vector.broadcast %cst_5 : f32 to vector<32x1xf32>
    %6 = arith.divf %4, %5 : vector<32x1xf32>
    %7 = vector.broadcast %6 : vector<32x1xf32> to vector<32x64xf32>
    %8 = arith.subf %0, %7 : vector<32x64xf32>
    %9 = arith.mulf %8, %8 : vector<32x64xf32>
    %cst_6 = arith.constant dense<0.000000e+00> : vector<32xf32>
    %10 = vector.multi_reduction <add>, %9, %cst_6 [1] : vector<32x64xf32> to vector<32xf32>
    %11 = vector.shape_cast %10 : vector<32xf32> to vector<32x1xf32>
    %cst_7 = arith.constant 6.400000e+01 : f32
    %12 = vector.broadcast %cst_7 : f32 to vector<32x1xf32>
    %13 = arith.divf %11, %12 : vector<32x1xf32>
    %14 = vector.broadcast %6 : vector<32x1xf32> to vector<32x64xf32>
    %15 = arith.subf %0, %14 : vector<32x64xf32>
    %cst_8 = arith.constant 9.99999974E-6 : f32
    %16 = vector.broadcast %cst_8 : f32 to vector<32x1xf32>
    %17 = arith.addf %13, %16 : vector<32x1xf32>
    %18 = math.rsqrt %17 : vector<32x1xf32>
    %19 = vector.broadcast %18 : vector<32x1xf32> to vector<32x64xf32>
    %20 = arith.mulf %15, %19 : vector<32x64xf32>
    %21 = vector.broadcast %1 : vector<1x64xf32> to vector<32x64xf32>
    %22 = arith.mulf %20, %21 : vector<32x64xf32>
    %23 = vector.broadcast %2 : vector<1x64xf32> to vector<32x64xf32>
    %24 = arith.addf %22, %23 : vector<32x64xf32>
    %25 = arith.truncf %24 : vector<32x64xf32> to vector<32x64xbf16>
    %c0_9 = arith.constant 0 : index
    %c0_10 = arith.constant 0 : index
    %26 = vector.load %arg5[%c0_9, %c0_10] : memref<128x64xf32, #tpu.memory_space<vmem>>, vector<128x64xf32>
    %27 = arith.truncf %26 : vector<128x64xf32> to vector<128x64xbf16>
    %cst_11 = arith.constant dense<0.000000e+00> : vector<32x128xf32>
    %28 = tpu.matmul %25, %27, %cst_11 {dimension_numbers = #tpu.dot_dimension_numbers<[1], [1], [0], [0], [0, 0, 1, 0], [], []>} : vector<32x64xbf16>, vector<128x64xbf16>, vector<32x128xf32> -> vector<32x128xf32>
    %c0_12 = arith.constant 0 : index
    %c0_13 = arith.constant 0 : index
    %29 = vector.load %arg6[%c0_12, %c0_13] : memref<32x128xf32, #tpu.memory_space<vmem>>, vector<32x128xf32>
    tpu.vector_store %arg6[%c0_12, %c0_13], %28 {strides = array<i32>} : memref<32x128xf32, #tpu.memory_space<vmem>>, vector<32x128xf32>,
    return
  }
  func.func @transform_0(%arg0: i32, %arg1: i32) -> (i32, i32) {
    %c0_i32 = arith.constant 0 : i32
    %c0_i32_0 = arith.constant 0 : i32
    return %arg0, %c0_i32 : i32, i32
  }
  func.func @transform_1(%arg0: i32, %arg1: i32) -> (i32, i32) {
    %c0_i32 = arith.constant 0 : i32
    %c0_i32_0 = arith.constant 0 : i32
    %c0_i32_1 = arith.constant 0 : i32
    return %c0_i32, %c0_i32_0 : i32, i32
  }
  func.func @transform_2(%arg0: i32, %arg1: i32) -> (i32, i32) {
    %c0_i32 = arith.constant 0 : i32
    %c0_i32_0 = arith.constant 0 : i32
    %c0_i32_1 = arith.constant 0 : i32
    return %c0_i32, %c0_i32_0 : i32, i32
  }
  func.func @transform_3(%arg0: i32, %arg1: i32) -> (i32, i32) {
    %c0_i32 = arith.constant 0 : i32
    %c0_i32_0 = arith.constant 0 : i32
    return %arg1, %c0_i32 : i32, i32
  }
  func.func @transform_4(%arg0: i32, %arg1: i32) -> (i32, i32) {
    %c0_i32 = arith.constant 0 : i32
    return %arg0, %arg1 : i32, i32
  }
}

module attributes {stable_mosaic.version = 11 : i64} {
  func.func @_block_kernel(%arg0: i32, %arg1: memref<1x16x64xf32, #tpu.memory_space<vmem>>, %arg2: memref<1x64xf32, #tpu.memory_space<vmem>>, %arg3: memref<1x64xf32, #tpu.memory_space<vmem>>, %arg4: memref<64x192xf32, #tpu.memory_space<vmem>>, %arg5: memref<1x192xf32, #tpu.memory_space<vmem>>, %arg6: memref<64x64xf32, #tpu.memory_space<vmem>>, %arg7: memref<1x64xf32, #tpu.memory_space<vmem>>, %arg8: memref<1x64xf32, #tpu.memory_space<vmem>>, %arg9: memref<1x64xf32, #tpu.memory_space<vmem>>, %arg10: memref<64x256xf32, #tpu.memory_space<vmem>>, %arg11: memref<1x256xf32, #tpu.memory_space<vmem>>, %arg12: memref<256x64xf32, #tpu.memory_space<vmem>>, %arg13: memref<1x64xf32, #tpu.memory_space<vmem>>, %arg14: memref<1x16x64xf32, #tpu.memory_space<vmem>>) attributes {dimension_semantics = [#tpu.dimension_semantics<parallel>], iteration_bounds = array<i64: 2>, scalar_prefetch = 0 : i64, scratch_operands = 0 : i64, tpu.core_type = #tpu.core_type<tc>, window_params = [{transform_indices = @transform_0, window_bounds = array<i64: 1, 16, 64>}, {pipeline_mode = #tpu.pipeline_mode<synchronous>, transform_indices = @transform_1, window_bounds = array<i64: 1, 64>}, {pipeline_mode = #tpu.pipeline_mode<synchronous>, transform_indices = @transform_2, window_bounds = array<i64: 1, 64>}, {pipeline_mode = #tpu.pipeline_mode<synchronous>, transform_indices = @transform_3, window_bounds = array<i64: 64, 192>}, {pipeline_mode = #tpu.pipeline_mode<synchronous>, transform_indices = @transform_4, window_bounds = array<i64: 1, 192>}, {pipeline_mode = #tpu.pipeline_mode<synchronous>, transform_indices = @transform_5, window_bounds = array<i64: 64, 64>}, {pipeline_mode = #tpu.pipeline_mode<synchronous>, transform_indices = @transform_6, window_bounds = array<i64: 1, 64>}, {pipeline_mode = #tpu.pipeline_mode<synchronous>, transform_indices = @transform_7, window_bounds = array<i64: 1, 64>}, {pipeline_mode = #tpu.pipeline_mode<synchronous>, transform_indices = @transform_8, window_bounds = array<i64: 1, 64>}, {pipeline_mode = #tpu.pipeline_mode<synchronous>, transform_indices = @transform_9, window_bounds = array<i64: 64, 256>}, {pipeline_mode = #tpu.pipeline_mode<synchronous>, transform_indices = @transform_10, window_bounds = array<i64: 1, 256>}, {pipeline_mode = #tpu.pipeline_mode<synchronous>, transform_indices = @transform_11, window_bounds = array<i64: 256, 64>}, {pipeline_mode = #tpu.pipeline_mode<synchronous>, transform_indices = @transform_12, window_bounds = array<i64: 1, 64>}, {transform_indices = @transform_13, window_bounds = array<i64: 1, 16, 64>}]} {
    %c0 = arith.constant 0 : index
    %c0_0 = arith.constant 0 : index
    %c0_1 = arith.constant 0 : index
    %0 = vector.load %arg1[%c0, %c0_0, %c0_1] : memref<1x16x64xf32, #tpu.memory_space<vmem>>, vector<1x16x64xf32>
    %1 = vector.shape_cast %0 : vector<1x16x64xf32> to vector<16x64xf32>
    %c0_2 = arith.constant 0 : index
    %c0_3 = arith.constant 0 : index
    %2 = vector.load %arg2[%c0_2, %c0_3] : memref<1x64xf32, #tpu.memory_space<vmem>>, vector<1x64xf32>
    %c0_4 = arith.constant 0 : index
    %c0_5 = arith.constant 0 : index
    %3 = vector.load %arg3[%c0_4, %c0_5] : memref<1x64xf32, #tpu.memory_space<vmem>>, vector<1x64xf32>
    %cst = arith.constant dense<0.000000e+00> : vector<16xf32>
    %4 = vector.multi_reduction <add>, %1, %cst [1] : vector<16x64xf32> to vector<16xf32>
    %5 = vector.shape_cast %4 : vector<16xf32> to vector<16x1xf32>
    %cst_6 = arith.constant 6.400000e+01 : f32
    %6 = vector.broadcast %cst_6 : f32 to vector<16x1xf32>
    %7 = arith.divf %5, %6 : vector<16x1xf32>
    %8 = vector.broadcast %7 : vector<16x1xf32> to vector<16x64xf32>
    %9 = arith.subf %1, %8 : vector<16x64xf32>
    %10 = arith.mulf %9, %9 : vector<16x64xf32>
    %cst_7 = arith.constant dense<0.000000e+00> : vector<16xf32>
    %11 = vector.multi_reduction <add>, %10, %cst_7 [1] : vector<16x64xf32> to vector<16xf32>
    %12 = vector.shape_cast %11 : vector<16xf32> to vector<16x1xf32>
    %cst_8 = arith.constant 6.400000e+01 : f32
    %13 = vector.broadcast %cst_8 : f32 to vector<16x1xf32>
    %14 = arith.divf %12, %13 : vector<16x1xf32>
    %15 = vector.broadcast %7 : vector<16x1xf32> to vector<16x64xf32>
    %16 = arith.subf %1, %15 : vector<16x64xf32>
    %cst_9 = arith.constant 9.99999974E-6 : f32
    %17 = vector.broadcast %cst_9 : f32 to vector<16x1xf32>
    %18 = arith.addf %14, %17 : vector<16x1xf32>
    %19 = math.rsqrt %18 : vector<16x1xf32>
    %20 = vector.broadcast %19 : vector<16x1xf32> to vector<16x64xf32>
    %21 = arith.mulf %16, %20 : vector<16x64xf32>
    %22 = vector.broadcast %2 : vector<1x64xf32> to vector<16x64xf32>
    %23 = arith.mulf %21, %22 : vector<16x64xf32>
    %24 = vector.broadcast %3 : vector<1x64xf32> to vector<16x64xf32>
    %25 = arith.addf %23, %24 : vector<16x64xf32>
    %c0_10 = arith.constant 0 : index
    %c0_11 = arith.constant 0 : index
    %26 = vector.load %arg4[%c0_10, %c0_11] : memref<64x192xf32, #tpu.memory_space<vmem>>, vector<64x192xf32>
    %27 = arith.truncf %25 : vector<16x64xf32> to vector<16x64xbf16>
    %28 = arith.truncf %26 : vector<64x192xf32> to vector<64x192xbf16>
    %cst_12 = arith.constant dense<0.000000e+00> : vector<16x192xf32>
    %29 = tpu.matmul %27, %28, %cst_12 {dimension_numbers = #tpu.dot_dimension_numbers<[1], [0], [0], [1], [0, 0, 1, 1], [], []>} : vector<16x64xbf16>, vector<64x192xbf16>, vector<16x192xf32> -> vector<16x192xf32>
    %c0_13 = arith.constant 0 : index
    %c0_14 = arith.constant 0 : index
    %30 = vector.load %arg5[%c0_13, %c0_14] : memref<1x192xf32, #tpu.memory_space<vmem>>, vector<1x192xf32>
    %31 = vector.broadcast %30 : vector<1x192xf32> to vector<16x192xf32>
    %32 = arith.addf %29, %31 : vector<16x192xf32>
    %33 = tpu.iota {dimensions = array<i32: 0>} : vector<16x16xi32>
    %34 = tpu.iota {dimensions = array<i32: 1>} : vector<16x16xi32>
    %35 = arith.cmpi sle, %34, %33 : vector<16x16xi32>
    %36 = vector.extract_strided_slice %32 {offsets = [0, 0], sizes = [16, 16], strides = [1, 1]} : vector<16x192xf32> to vector<16x16xf32>
    %37 = vector.extract_strided_slice %32 {offsets = [0, 64], sizes = [16, 16], strides = [1, 1]} : vector<16x192xf32> to vector<16x16xf32>
    %38 = vector.extract_strided_slice %32 {offsets = [0, 128], sizes = [16, 16], strides = [1, 1]} : vector<16x192xf32> to vector<16x16xf32>
    %39 = arith.truncf %36 : vector<16x16xf32> to vector<16x16xbf16>
    %40 = arith.truncf %37 : vector<16x16xf32> to vector<16x16xbf16>
    %cst_15 = arith.constant dense<0.000000e+00> : vector<16x16xf32>
    %41 = tpu.matmul %39, %40, %cst_15 {dimension_numbers = #tpu.dot_dimension_numbers<[1], [1], [0], [0], [0, 0, 1, 0], [], []>} : vector<16x16xbf16>, vector<16x16xbf16>, vector<16x16xf32> -> vector<16x16xf32>
    %cst_16 = arith.constant 2.500000e-01 : f32
    %42 = vector.broadcast %cst_16 : f32 to vector<16x16xf32>
    %43 = arith.mulf %41, %42 : vector<16x16xf32>
    %cst_17 = arith.constant -1.000000e+30 : f32
    %44 = vector.broadcast %cst_17 : f32 to vector<16x16xf32>
    %45 = arith.select %35, %43, %44 : vector<16x16xi1>, vector<16x16xf32>
    %cst_18 = arith.constant dense<0xFF800000> : vector<16xf32>
    %46 = vector.multi_reduction <maximumf>, %45, %cst_18 [1] : vector<16x16xf32> to vector<16xf32>
    %47 = vector.shape_cast %46 : vector<16xf32> to vector<16x1xf32>
    %48 = vector.broadcast %47 : vector<16x1xf32> to vector<16x16xf32>
    %49 = arith.subf %45, %48 : vector<16x16xf32>
    %50 = math.exp %49 : vector<16x16xf32>
    %cst_19 = arith.constant dense<0.000000e+00> : vector<16xf32>
    %51 = vector.multi_reduction <add>, %50, %cst_19 [1] : vector<16x16xf32> to vector<16xf32>
    %52 = vector.shape_cast %51 : vector<16xf32> to vector<16x1xf32>
    %53 = tpu.reciprocal %52 {approx = true} : vector<16x1xf32> -> vector<16x1xf32>
    %54 = vector.broadcast %53 : vector<16x1xf32> to vector<16x16xf32>
    %55 = arith.mulf %50, %54 : vector<16x16xf32>
    %56 = arith.truncf %55 : vector<16x16xf32> to vector<16x16xbf16>
    %57 = arith.truncf %38 : vector<16x16xf32> to vector<16x16xbf16>
    %cst_20 = arith.constant dense<0.000000e+00> : vector<16x16xf32>
    %58 = tpu.matmul %56, %57, %cst_20 {dimension_numbers = #tpu.dot_dimension_numbers<[1], [0], [0], [1], [0, 0, 1, 1], [], []>} : vector<16x16xbf16>, vector<16x16xbf16>, vector<16x16xf32> -> vector<16x16xf32>
    %59 = vector.extract_strided_slice %32 {offsets = [0, 16], sizes = [16, 16], strides = [1, 1]} : vector<16x192xf32> to vector<16x16xf32>
    %60 = vector.extract_strided_slice %32 {offsets = [0, 80], sizes = [16, 16], strides = [1, 1]} : vector<16x192xf32> to vector<16x16xf32>
    %61 = vector.extract_strided_slice %32 {offsets = [0, 144], sizes = [16, 16], strides = [1, 1]} : vector<16x192xf32> to vector<16x16xf32>
    %62 = arith.truncf %59 : vector<16x16xf32> to vector<16x16xbf16>
    %63 = arith.truncf %60 : vector<16x16xf32> to vector<16x16xbf16>
    %cst_21 = arith.constant dense<0.000000e+00> : vector<16x16xf32>
    %64 = tpu.matmul %62, %63, %cst_21 {dimension_numbers = #tpu.dot_dimension_numbers<[1], [1], [0], [0], [0, 0, 1, 0], [], []>} : vector<16x16xbf16>, vector<16x16xbf16>, vector<16x16xf32> -> vector<16x16xf32>
    %cst_22 = arith.constant 2.500000e-01 : f32
    %65 = vector.broadcast %cst_22 : f32 to vector<16x16xf32>
    %66 = arith.mulf %64, %65 : vector<16x16xf32>
    %cst_23 = arith.constant -1.000000e+30 : f32
    %67 = vector.broadcast %cst_23 : f32 to vector<16x16xf32>
    %68 = arith.select %35, %66, %67 : vector<16x16xi1>, vector<16x16xf32>
    %cst_24 = arith.constant dense<0xFF800000> : vector<16xf32>
    %69 = vector.multi_reduction <maximumf>, %68, %cst_24 [1] : vector<16x16xf32> to vector<16xf32>
    %70 = vector.shape_cast %69 : vector<16xf32> to vector<16x1xf32>
    %71 = vector.broadcast %70 : vector<16x1xf32> to vector<16x16xf32>
    %72 = arith.subf %68, %71 : vector<16x16xf32>
    %73 = math.exp %72 : vector<16x16xf32>
    %cst_25 = arith.constant dense<0.000000e+00> : vector<16xf32>
    %74 = vector.multi_reduction <add>, %73, %cst_25 [1] : vector<16x16xf32> to vector<16xf32>
    %75 = vector.shape_cast %74 : vector<16xf32> to vector<16x1xf32>
    %76 = tpu.reciprocal %75 {approx = true} : vector<16x1xf32> -> vector<16x1xf32>
    %77 = vector.broadcast %76 : vector<16x1xf32> to vector<16x16xf32>
    %78 = arith.mulf %73, %77 : vector<16x16xf32>
    %79 = arith.truncf %78 : vector<16x16xf32> to vector<16x16xbf16>
    %80 = arith.truncf %61 : vector<16x16xf32> to vector<16x16xbf16>
    %cst_26 = arith.constant dense<0.000000e+00> : vector<16x16xf32>
    %81 = tpu.matmul %79, %80, %cst_26 {dimension_numbers = #tpu.dot_dimension_numbers<[1], [0], [0], [1], [0, 0, 1, 1], [], []>} : vector<16x16xbf16>, vector<16x16xbf16>, vector<16x16xf32> -> vector<16x16xf32>
    %82 = vector.extract_strided_slice %32 {offsets = [0, 32], sizes = [16, 16], strides = [1, 1]} : vector<16x192xf32> to vector<16x16xf32>
    %83 = vector.extract_strided_slice %32 {offsets = [0, 96], sizes = [16, 16], strides = [1, 1]} : vector<16x192xf32> to vector<16x16xf32>
    %84 = vector.extract_strided_slice %32 {offsets = [0, 160], sizes = [16, 16], strides = [1, 1]} : vector<16x192xf32> to vector<16x16xf32>
    %85 = arith.truncf %82 : vector<16x16xf32> to vector<16x16xbf16>
    %86 = arith.truncf %83 : vector<16x16xf32> to vector<16x16xbf16>
    %cst_27 = arith.constant dense<0.000000e+00> : vector<16x16xf32>
    %87 = tpu.matmul %85, %86, %cst_27 {dimension_numbers = #tpu.dot_dimension_numbers<[1], [1], [0], [0], [0, 0, 1, 0], [], []>} : vector<16x16xbf16>, vector<16x16xbf16>, vector<16x16xf32> -> vector<16x16xf32>
    %cst_28 = arith.constant 2.500000e-01 : f32
    %88 = vector.broadcast %cst_28 : f32 to vector<16x16xf32>
    %89 = arith.mulf %87, %88 : vector<16x16xf32>
    %cst_29 = arith.constant -1.000000e+30 : f32
    %90 = vector.broadcast %cst_29 : f32 to vector<16x16xf32>
    %91 = arith.select %35, %89, %90 : vector<16x16xi1>, vector<16x16xf32>
    %cst_30 = arith.constant dense<0xFF800000> : vector<16xf32>
    %92 = vector.multi_reduction <maximumf>, %91, %cst_30 [1] : vector<16x16xf32> to vector<16xf32>
    %93 = vector.shape_cast %92 : vector<16xf32> to vector<16x1xf32>
    %94 = vector.broadcast %93 : vector<16x1xf32> to vector<16x16xf32>
    %95 = arith.subf %91, %94 : vector<16x16xf32>
    %96 = math.exp %95 : vector<16x16xf32>
    %cst_31 = arith.constant dense<0.000000e+00> : vector<16xf32>
    %97 = vector.multi_reduction <add>, %96, %cst_31 [1] : vector<16x16xf32> to vector<16xf32>
    %98 = vector.shape_cast %97 : vector<16xf32> to vector<16x1xf32>
    %99 = tpu.reciprocal %98 {approx = true} : vector<16x1xf32> -> vector<16x1xf32>
    %100 = vector.broadcast %99 : vector<16x1xf32> to vector<16x16xf32>
    %101 = arith.mulf %96, %100 : vector<16x16xf32>
    %102 = arith.truncf %101 : vector<16x16xf32> to vector<16x16xbf16>
    %103 = arith.truncf %84 : vector<16x16xf32> to vector<16x16xbf16>
    %cst_32 = arith.constant dense<0.000000e+00> : vector<16x16xf32>
    %104 = tpu.matmul %102, %103, %cst_32 {dimension_numbers = #tpu.dot_dimension_numbers<[1], [0], [0], [1], [0, 0, 1, 1], [], []>} : vector<16x16xbf16>, vector<16x16xbf16>, vector<16x16xf32> -> vector<16x16xf32>
    %105 = vector.extract_strided_slice %32 {offsets = [0, 48], sizes = [16, 16], strides = [1, 1]} : vector<16x192xf32> to vector<16x16xf32>
    %106 = vector.extract_strided_slice %32 {offsets = [0, 112], sizes = [16, 16], strides = [1, 1]} : vector<16x192xf32> to vector<16x16xf32>
    %107 = vector.extract_strided_slice %32 {offsets = [0, 176], sizes = [16, 16], strides = [1, 1]} : vector<16x192xf32> to vector<16x16xf32>
    %108 = arith.truncf %105 : vector<16x16xf32> to vector<16x16xbf16>
    %109 = arith.truncf %106 : vector<16x16xf32> to vector<16x16xbf16>
    %cst_33 = arith.constant dense<0.000000e+00> : vector<16x16xf32>
    %110 = tpu.matmul %108, %109, %cst_33 {dimension_numbers = #tpu.dot_dimension_numbers<[1], [1], [0], [0], [0, 0, 1, 0], [], []>} : vector<16x16xbf16>, vector<16x16xbf16>, vector<16x16xf32> -> vector<16x16xf32>
    %cst_34 = arith.constant 2.500000e-01 : f32
    %111 = vector.broadcast %cst_34 : f32 to vector<16x16xf32>
    %112 = arith.mulf %110, %111 : vector<16x16xf32>
    %cst_35 = arith.constant -1.000000e+30 : f32
    %113 = vector.broadcast %cst_35 : f32 to vector<16x16xf32>
    %114 = arith.select %35, %112, %113 : vector<16x16xi1>, vector<16x16xf32>
    %cst_36 = arith.constant dense<0xFF800000> : vector<16xf32>
    %115 = vector.multi_reduction <maximumf>, %114, %cst_36 [1] : vector<16x16xf32> to vector<16xf32>
    %116 = vector.shape_cast %115 : vector<16xf32> to vector<16x1xf32>
    %117 = vector.broadcast %116 : vector<16x1xf32> to vector<16x16xf32>
    %118 = arith.subf %114, %117 : vector<16x16xf32>
    %119 = math.exp %118 : vector<16x16xf32>
    %cst_37 = arith.constant dense<0.000000e+00> : vector<16xf32>
    %120 = vector.multi_reduction <add>, %119, %cst_37 [1] : vector<16x16xf32> to vector<16xf32>
    %121 = vector.shape_cast %120 : vector<16xf32> to vector<16x1xf32>
    %122 = tpu.reciprocal %121 {approx = true} : vector<16x1xf32> -> vector<16x1xf32>
    %123 = vector.broadcast %122 : vector<16x1xf32> to vector<16x16xf32>
    %124 = arith.mulf %119, %123 : vector<16x16xf32>
    %125 = arith.truncf %124 : vector<16x16xf32> to vector<16x16xbf16>
    %126 = arith.truncf %107 : vector<16x16xf32> to vector<16x16xbf16>
    %cst_38 = arith.constant dense<0.000000e+00> : vector<16x16xf32>
    %127 = tpu.matmul %125, %126, %cst_38 {dimension_numbers = #tpu.dot_dimension_numbers<[1], [0], [0], [1], [0, 0, 1, 1], [], []>} : vector<16x16xbf16>, vector<16x16xbf16>, vector<16x16xf32> -> vector<16x16xf32>
    %128 = tpu.concatenate %58, %81, %104, %127 in 1 : vector<16x16xf32>, vector<16x16xf32>, vector<16x16xf32>, vector<16x16xf32> -> vector<16x64xf32>
    %c0_39 = arith.constant 0 : index
    %c0_40 = arith.constant 0 : index
    %129 = vector.load %arg6[%c0_39, %c0_40] : memref<64x64xf32, #tpu.memory_space<vmem>>, vector<64x64xf32>
    %130 = arith.truncf %128 : vector<16x64xf32> to vector<16x64xbf16>
    %131 = arith.truncf %129 : vector<64x64xf32> to vector<64x64xbf16>
    %cst_41 = arith.constant dense<0.000000e+00> : vector<16x64xf32>
    %132 = tpu.matmul %130, %131, %cst_41 {dimension_numbers = #tpu.dot_dimension_numbers<[1], [0], [0], [1], [0, 0, 1, 1], [], []>} : vector<16x64xbf16>, vector<64x64xbf16>, vector<16x64xf32> -> vector<16x64xf32>
    %133 = arith.addf %1, %132 : vector<16x64xf32>
    %c0_42 = arith.constant 0 : index
    %c0_43 = arith.constant 0 : index
    %134 = vector.load %arg7[%c0_42, %c0_43] : memref<1x64xf32, #tpu.memory_space<vmem>>, vector<1x64xf32>
    %135 = vector.broadcast %134 : vector<1x64xf32> to vector<16x64xf32>
    %136 = arith.addf %133, %135 : vector<16x64xf32>
    %c0_44 = arith.constant 0 : index
    %c0_45 = arith.constant 0 : index
    %137 = vector.load %arg8[%c0_44, %c0_45] : memref<1x64xf32, #tpu.memory_space<vmem>>, vector<1x64xf32>
    %c0_46 = arith.constant 0 : index
    %c0_47 = arith.constant 0 : index
    %138 = vector.load %arg9[%c0_46, %c0_47] : memref<1x64xf32, #tpu.memory_space<vmem>>, vector<1x64xf32>
    %cst_48 = arith.constant dense<0.000000e+00> : vector<16xf32>
    %139 = vector.multi_reduction <add>, %136, %cst_48 [1] : vector<16x64xf32> to vector<16xf32>
    %140 = vector.shape_cast %139 : vector<16xf32> to vector<16x1xf32>
    %cst_49 = arith.constant 6.400000e+01 : f32
    %141 = vector.broadcast %cst_49 : f32 to vector<16x1xf32>
    %142 = arith.divf %140, %141 : vector<16x1xf32>
    %143 = vector.broadcast %142 : vector<16x1xf32> to vector<16x64xf32>
    %144 = arith.subf %136, %143 : vector<16x64xf32>
    %145 = arith.mulf %144, %144 : vector<16x64xf32>
    %cst_50 = arith.constant dense<0.000000e+00> : vector<16xf32>
    %146 = vector.multi_reduction <add>, %145, %cst_50 [1] : vector<16x64xf32> to vector<16xf32>
    %147 = vector.shape_cast %146 : vector<16xf32> to vector<16x1xf32>
    %cst_51 = arith.constant 6.400000e+01 : f32
    %148 = vector.broadcast %cst_51 : f32 to vector<16x1xf32>
    %149 = arith.divf %147, %148 : vector<16x1xf32>
    %150 = vector.broadcast %142 : vector<16x1xf32> to vector<16x64xf32>
    %151 = arith.subf %136, %150 : vector<16x64xf32>
    %cst_52 = arith.constant 9.99999974E-6 : f32
    %152 = vector.broadcast %cst_52 : f32 to vector<16x1xf32>
    %153 = arith.addf %149, %152 : vector<16x1xf32>
    %154 = math.rsqrt %153 : vector<16x1xf32>
    %155 = vector.broadcast %154 : vector<16x1xf32> to vector<16x64xf32>
    %156 = arith.mulf %151, %155 : vector<16x64xf32>
    %157 = vector.broadcast %137 : vector<1x64xf32> to vector<16x64xf32>
    %158 = arith.mulf %156, %157 : vector<16x64xf32>
    %159 = vector.broadcast %138 : vector<1x64xf32> to vector<16x64xf32>
    %160 = arith.addf %158, %159 : vector<16x64xf32>
    %c0_53 = arith.constant 0 : index
    %c0_54 = arith.constant 0 : index
    %161 = vector.load %arg10[%c0_53, %c0_54] : memref<64x256xf32, #tpu.memory_space<vmem>>, vector<64x256xf32>
    %162 = arith.truncf %160 : vector<16x64xf32> to vector<16x64xbf16>
    %163 = arith.truncf %161 : vector<64x256xf32> to vector<64x256xbf16>
    %cst_55 = arith.constant dense<0.000000e+00> : vector<16x256xf32>
    %164 = tpu.matmul %162, %163, %cst_55 {dimension_numbers = #tpu.dot_dimension_numbers<[1], [0], [0], [1], [0, 0, 1, 1], [], []>} : vector<16x64xbf16>, vector<64x256xbf16>, vector<16x256xf32> -> vector<16x256xf32>
    %c0_56 = arith.constant 0 : index
    %c0_57 = arith.constant 0 : index
    %165 = vector.load %arg11[%c0_56, %c0_57] : memref<1x256xf32, #tpu.memory_space<vmem>>, vector<1x256xf32>
    %166 = vector.broadcast %165 : vector<1x256xf32> to vector<16x256xf32>
    %167 = arith.addf %164, %166 : vector<16x256xf32>
    %cst_58 = arith.constant 5.000000e-01 : f32
    %168 = vector.broadcast %cst_58 : f32 to vector<16x256xf32>
    %169 = arith.mulf %168, %167 : vector<16x256xf32>
    %cst_59 = arith.constant 4.471500e-02 : f32
    %170 = vector.broadcast %cst_59 : f32 to vector<16x256xf32>
    %171 = arith.mulf %170, %167 : vector<16x256xf32>
    %172 = arith.mulf %171, %167 : vector<16x256xf32>
    %173 = arith.mulf %172, %167 : vector<16x256xf32>
    %174 = arith.addf %167, %173 : vector<16x256xf32>
    %cst_60 = arith.constant 0.797884583 : f32
    %175 = vector.broadcast %cst_60 : f32 to vector<16x256xf32>
    %176 = arith.mulf %175, %174 : vector<16x256xf32>
    %177 = math.tanh %176 : vector<16x256xf32>
    %cst_61 = arith.constant 1.000000e+00 : f32
    %178 = vector.broadcast %cst_61 : f32 to vector<16x256xf32>
    %179 = arith.addf %178, %177 : vector<16x256xf32>
    %180 = arith.mulf %169, %179 : vector<16x256xf32>
    %c0_62 = arith.constant 0 : index
    %c0_63 = arith.constant 0 : index
    %181 = vector.load %arg12[%c0_62, %c0_63] : memref<256x64xf32, #tpu.memory_space<vmem>>, vector<256x64xf32>
    %182 = arith.truncf %180 : vector<16x256xf32> to vector<16x256xbf16>
    %183 = arith.truncf %181 : vector<256x64xf32> to vector<256x64xbf16>
    %cst_64 = arith.constant dense<0.000000e+00> : vector<16x64xf32>
    %184 = tpu.matmul %182, %183, %cst_64 {dimension_numbers = #tpu.dot_dimension_numbers<[1], [0], [0], [1], [0, 0, 1, 1], [], []>} : vector<16x256xbf16>, vector<256x64xbf16>, vector<16x64xf32> -> vector<16x64xf32>
    %185 = arith.addf %136, %184 : vector<16x64xf32>
    %c0_65 = arith.constant 0 : index
    %c0_66 = arith.constant 0 : index
    %186 = vector.load %arg13[%c0_65, %c0_66] : memref<1x64xf32, #tpu.memory_space<vmem>>, vector<1x64xf32>
    %187 = vector.broadcast %186 : vector<1x64xf32> to vector<16x64xf32>
    %188 = arith.addf %185, %187 : vector<16x64xf32>
    %c0_67 = arith.constant 0 : index
    %c0_68 = arith.constant 0 : index
    %c0_69 = arith.constant 0 : index
    %189 = vector.load %arg14[%c0_67, %c0_68, %c0_69] : memref<1x16x64xf32, #tpu.memory_space<vmem>>, vector<1x16x64xf32>
    %190 = vector.shape_cast %189 : vector<1x16x64xf32> to vector<16x64xf32>
    %191 = vector.shape_cast %188 : vector<16x64xf32> to vector<1x16x64xf32>
    tpu.vector_store %arg14[%c0_67, %c0_68, %c0_69], %191 {strides = array<i32>} : memref<1x16x64xf32, #tpu.memory_space<vmem>>, vector<1x16x64xf32>,
    return
  }
  func.func @transform_0(%arg0: i32) -> (i32, i32, i32) {
    %c0_i32 = arith.constant 0 : i32
    %c0_i32_0 = arith.constant 0 : i32
    %c0_i32_1 = arith.constant 0 : i32
    return %arg0, %c0_i32, %c0_i32_0 : i32, i32, i32
  }
  func.func @transform_1(%arg0: i32) -> (i32, i32) {
    %c0_i32 = arith.constant 0 : i32
    %c0_i32_0 = arith.constant 0 : i32
    %c0_i32_1 = arith.constant 0 : i32
    return %c0_i32, %c0_i32_0 : i32, i32
  }
  func.func @transform_2(%arg0: i32) -> (i32, i32) {
    %c0_i32 = arith.constant 0 : i32
    %c0_i32_0 = arith.constant 0 : i32
    %c0_i32_1 = arith.constant 0 : i32
    return %c0_i32, %c0_i32_0 : i32, i32
  }
  func.func @transform_3(%arg0: i32) -> (i32, i32) {
    %c0_i32 = arith.constant 0 : i32
    %c0_i32_0 = arith.constant 0 : i32
    %c0_i32_1 = arith.constant 0 : i32
    return %c0_i32, %c0_i32_0 : i32, i32
  }
  func.func @transform_4(%arg0: i32) -> (i32, i32) {
    %c0_i32 = arith.constant 0 : i32
    %c0_i32_0 = arith.constant 0 : i32
    %c0_i32_1 = arith.constant 0 : i32
    return %c0_i32, %c0_i32_0 : i32, i32
  }
  func.func @transform_5(%arg0: i32) -> (i32, i32) {
    %c0_i32 = arith.constant 0 : i32
    %c0_i32_0 = arith.constant 0 : i32
    %c0_i32_1 = arith.constant 0 : i32
    return %c0_i32, %c0_i32_0 : i32, i32
  }
  func.func @transform_6(%arg0: i32) -> (i32, i32) {
    %c0_i32 = arith.constant 0 : i32
    %c0_i32_0 = arith.constant 0 : i32
    %c0_i32_1 = arith.constant 0 : i32
    return %c0_i32, %c0_i32_0 : i32, i32
  }
  func.func @transform_7(%arg0: i32) -> (i32, i32) {
    %c0_i32 = arith.constant 0 : i32
    %c0_i32_0 = arith.constant 0 : i32
    %c0_i32_1 = arith.constant 0 : i32
    return %c0_i32, %c0_i32_0 : i32, i32
  }
  func.func @transform_8(%arg0: i32) -> (i32, i32) {
    %c0_i32 = arith.constant 0 : i32
    %c0_i32_0 = arith.constant 0 : i32
    %c0_i32_1 = arith.constant 0 : i32
    return %c0_i32, %c0_i32_0 : i32, i32
  }
  func.func @transform_9(%arg0: i32) -> (i32, i32) {
    %c0_i32 = arith.constant 0 : i32
    %c0_i32_0 = arith.constant 0 : i32
    %c0_i32_1 = arith.constant 0 : i32
    return %c0_i32, %c0_i32_0 : i32, i32
  }
  func.func @transform_10(%arg0: i32) -> (i32, i32) {
    %c0_i32 = arith.constant 0 : i32
    %c0_i32_0 = arith.constant 0 : i32
    %c0_i32_1 = arith.constant 0 : i32
    return %c0_i32, %c0_i32_0 : i32, i32
  }
  func.func @transform_11(%arg0: i32) -> (i32, i32) {
    %c0_i32 = arith.constant 0 : i32
    %c0_i32_0 = arith.constant 0 : i32
    %c0_i32_1 = arith.constant 0 : i32
    return %c0_i32, %c0_i32_0 : i32, i32
  }
  func.func @transform_12(%arg0: i32) -> (i32, i32) {
    %c0_i32 = arith.constant 0 : i32
    %c0_i32_0 = arith.constant 0 : i32
    %c0_i32_1 = arith.constant 0 : i32
    return %c0_i32, %c0_i32_0 : i32, i32
  }
  func.func @transform_13(%arg0: i32) -> (i32, i32, i32) {
    %c0_i32 = arith.constant 0 : i32
    %c0_i32_0 = arith.constant 0 : i32
    %c0_i32_1 = arith.constant 0 : i32
    return %arg0, %c0_i32, %c0_i32_0 : i32, i32, i32
  }
}

</mosaic_0001>

<llo_original>
// kernel: tamil_gpt_forward.5
$region0: #{tamil_gpt_forward.5}
  #allocation0 [shape = 'u32[]', space=smem, size = 0x4, offset = 0x4, fixed_abs, tag = 'smem constant byte address 0x4 - core index']
  #allocation1 [shape = 'u32[72,128]{1,0:T(1,128)}', space=vmem, size = 0x9000, scoped, tag = 'internal scratch']
  %s0 = inlined_call_operand.vmem [shape: f32[32,64], index: 0, kind: input, shape index: {}]
  %s1 = inlined_call_operand.vmem [shape: f32[1,64], index: 1, kind: input, shape index: {}]
  %s2 = inlined_call_operand.vmem [shape: f32[1,64], index: 2, kind: input, shape index: {}]
  %s3 = inlined_call_operand.vmem [shape: f32[256,64], index: 3, kind: input, shape index: {}]
  %s4 = inlined_call_operand.hbm [shape: f32[32,256], index: 4, kind: output, shape index: {}]
  %s5 = sld [smem:[#allocation0]]
  $region49: #{tamil_gpt_forward.5} parent=0
    _
  %s7 = ssub.s32 1, %s5
  %s8 = scalar_select 0, %s7, %s5
  $region1: #{tamil_gpt_forward.5} parent=0
    #allocation2 [shape = 'u8[32768]{0}', space=vmem, size = 0x8000, scoped, tag = 'output window, operand 0']
    #allocation3 [shape = 's32[2]{0}', space=sflag, size = 0x8, scoped, tag = 'scoped memory for tamil_gpt_forward.5']
    %9 = vsyncpa [#allocation3], 0
    %s10 = scalar_lea.sflag [#allocation3], 1
    %11 = vsyncpa %s10, 0
    loop: start=0, step=1, limit=4
    $region2: #{tamil_gpt_forward.5} parent=1 // loop_pre_header
      _
    $region3: #{tamil_gpt_forward.5} parent=1 // loop_header
      %s13 = sphi 0, %s17
      %p14 = scmp.ge.s32.totalorder %s13, 4
      %s20 = sphi 0, %s32
      %s21 = sphi 0, %s28
      %s22 = sphi 0, %s20
      %s23 = sphi 0, %s21
      %s24 = sphi 0, %s22
      %s25 = sphi 0, %s23
      %s35 = sphi 0, %s37
      %s38 = sphi 0, %s35
      %s39 = sphi 0, %s38
      %s55 = sphi 0, %s39
      %s59 = sphi 0, %s59
      %s61 = sphi 0, %s59
      %s62 = sphi 0, %s61
      %s76 = sphi 0, %s62
      %s80 = sphi 0, %s80
      %s82 = sphi 0, %s80
      %s83 = sphi 0, %s82
      %s97 = sphi 0, %s83
      %s103 = sphi 0, %s105
      %s106 = sphi 0, %s103
      %s107 = sphi 0, %s106
      %s123 = sphi 0, %s107
      %s131 = sphi 0, %s133
      %s134 = sphi 0, %s131
      %s135 = sphi 0, %s134
      %s151 = sphi 0, %s135
    $region4: #{tamil_gpt_forward.5} parent=1 // loop_header_branch
      %16 = sbr.rel (%p14) target = $region8
    $region5: #{tamil_gpt_forward.5} parent=1 // loop_body
      %s18 = ssub.s32 %s13, 1
      %s19 = ssub.s32 %s13, 2
      %s26 = sadd.s32 1, %s21
      %p27 = scmp.ge.s32.totalorder %s26, 2
      %s28 = scalar_select %p27, 0, %s26
      %s29 = sadd.s32 1, %s20
      %s30 = scalar_select %p27, %s29, %s20
      %p31 = scmp.ge.s32.totalorder %s30, 1
      %s32 = scalar_select %p31, 0, %s30
      %s33 = ssub.s32 %s20, %s32
      %p34 = scmp.eq.s32.totalorder %s33, 0
      %s36 = sadd.s32 %s35, 1
      %s37 = scalar_select %p34, %s35, %s36
      %p40 = pneg %p34
      %p41 = scmp.eq.s32.totalorder %s13, 1
      %p42 = por %p40, %p41
      %p43 = scmp.ne.s32.totalorder %s35, %s38
      %p44 = scmp.eq.s32.totalorder %s13, 0
      %p45 = por %p43, %p44
      %p46 = scmp.ne.s32.totalorder %s35, %s38
      %p47 = scmp.eq.s32.totalorder %s18, 1
      %p48 = por %p46, %p47
      %p49 = scmp.ne.s32.totalorder %s38, %s39
      %p50 = scmp.eq.s32.totalorder %s18, 0
      %p51 = por %p49, %p50
      %p52 = scmp.ne.s32.totalorder %s38, %s39
      %p53 = scmp.eq.s32.totalorder %s19, 1
      %p54 = por %p52, %p53
      %p56 = scmp.ne.s32.totalorder %s39, %s55
      %p57 = scmp.eq.s32.totalorder %s19, 0
      %p58 = por %p56, %p57
      %s60 = sadd.s32 %s59, 1
      %p63 = scmp.eq.s32.totalorder %s13, 1
      %p64 = scmp.ne.s32.totalorder %s59, %s61
      %p65 = scmp.eq.s32.totalorder %s13, 0
      %p66 = por %p64, %p65
      %p67 = scmp.ne.s32.totalorder %s59, %s61
      %p68 = scmp.eq.s32.totalorder %s18, 1
      %p69 = por %p67, %p68
      %p70 = scmp.ne.s32.totalorder %s61, %s62
      %p71 = scmp.eq.s32.totalorder %s18, 0
      %p72 = por %p70, %p71
      %p73 = scmp.ne.s32.totalorder %s61, %s62
      %p74 = scmp.eq.s32.totalorder %s19, 1
      %p75 = por %p73, %p74
      %p77 = scmp.ne.s32.totalorder %s62, %s76
      %p78 = scmp.eq.s32.totalorder %s19, 0
      %p79 = por %p77, %p78
      %s81 = sadd.s32 %s80, 1
      %p84 = scmp.eq.s32.totalorder %s13, 1
      %p85 = scmp.ne.s32.totalorder %s80, %s82
      %p86 = scmp.eq.s32.totalorder %s13, 0
      %p87 = por %p85, %p86
      %p88 = scmp.ne.s32.totalorder %s80, %s82
      %p89 = scmp.eq.s32.totalorder %s18, 1
      %p90 = por %p88, %p89
      %p91 = scmp.ne.s32.totalorder %s82, %s83
      %p92 = scmp.eq.s32.totalorder %s18, 0
      %p93 = por %p91, %p92
      %p94 = scmp.ne.s32.totalorder %s82, %s83
      %p95 = scmp.eq.s32.totalorder %s19, 1
      %p96 = por %p94, %p95
      %p98 = scmp.ne.s32.totalorder %s83, %s97
      %p99 = scmp.eq.s32.totalorder %s19, 0
      %p100 = por %p98, %p99
      %s101 = ssub.s32 %s21, %s28
      %p102 = scmp.eq.s32.totalorder %s101, 0
      %s104 = sadd.s32 %s103, 1
      %s105 = scalar_select %p102, %s103, %s104
      %p108 = pneg %p102
      %p109 = scmp.eq.s32.totalorder %s13, 1
      %p110 = por %p108, %p109
      %p111 = scmp.ne.s32.totalorder %s103, %s106
      %p112 = scmp.eq.s32.totalorder %s13, 0
      %p113 = por %p111, %p112
      %p114 = scmp.ne.s32.totalorder %s103, %s106
      %p115 = scmp.eq.s32.totalorder %s18, 1
      %p116 = por %p114, %p115
      %p117 = scmp.ne.s32.totalorder %s106, %s107
      %p118 = scmp.eq.s32.totalorder %s18, 0
      %p119 = por %p117, %p118
      %p120 = scmp.ne.s32.totalorder %s106, %s107
      %p121 = scmp.eq.s32.totalorder %s19, 1
      %p122 = por %p120, %p121
      %p124 = scmp.ne.s32.totalorder %s107, %s123
      %p125 = scmp.eq.s32.totalorder %s19, 0
      %p126 = por %p124, %p125
      %s127 = ssub.s32 %s20, %s32
      %s128 = ssub.s32 %s21, %s28
      %s129 = sor.u32 %s127, %s128
      %p130 = scmp.eq.s32.totalorder %s129, 0
      %s132 = sadd.s32 %s131, 1
      %s133 = scalar_select %p130, %s131, %s132
      %p136 = pneg %p130
      %p137 = scmp.eq.s32.totalorder %s13, 1
      %p138 = por %p136, %p137
      %p139 = scmp.ne.s32.totalorder %s131, %s134
      %p140 = scmp.eq.s32.totalorder %s13, 0
      %p141 = por %p139, %p140
      %p142 = scmp.ne.s32.totalorder %s131, %s134
      %p143 = scmp.eq.s32.totalorder %s18, 1
      %p144 = por %p142, %p143
      %p145 = scmp.ne.s32.totalorder %s134, %s135
      %p146 = scmp.eq.s32.totalorder %s18, 0
      %p147 = por %p145, %p146
      %p148 = scmp.ne.s32.totalorder %s134, %s135
      %p149 = scmp.eq.s32.totalorder %s19, 1
      %p150 = por %p148, %p149
      %p152 = scmp.ne.s32.totalorder %s135, %s151
      %p153 = scmp.eq.s32.totalorder %s19, 0
      %p154 = por %p152, %p153
      %p155 = scmp.le.s32.totalorder 1, %s13
      %p156 = scmp.lt.s32.totalorder %s13, 3
      %p157 = pnand %p155, %p156
      %p158 = pneg %p157
      // Predicated region
      $region9: #{tamil_gpt_forward.5} parent=5 // pred_check
        _
      $region10: #{tamil_gpt_forward.5} parent=5 // pred_check_branch
        %160 = sbr.rel (%p157) target = $region12
      $region11: #{tamil_gpt_forward.5} parent=5 // pred_region
        %s161 = ssub.s32 %s13, 1
        // Predicated region
        $region13: #{tamil_gpt_forward.5} parent=11 // pred_check
          %p162 = pneg %p51
        $region14: #{tamil_gpt_forward.5} parent=11 // pred_check_branch
          %164 = sbr.rel (%p162) target = $region16
        $region15: #{tamil_gpt_forward.5} parent=11 // pred_region
          %s165 = smul.u32 4, %s22
          %p166 = scmp.lt.s32.totalorder %s165, 3
          %s167 = scalar_select %p166, %s165, 3
          %s168 = smul.addr %s167, 8
          %s169 = scalar_lea.vmem %s0, %s168
          %s170 = smul.u32 4, %s22
        $region16: #{tamil_gpt_forward.5} parent=11 // pred_fallthru
          _
        // Predicated region
        $region17: #{tamil_gpt_forward.5} parent=11 // pred_check
          %p171 = pneg %p72
        $region18: #{tamil_gpt_forward.5} parent=11 // pred_check_branch
          %173 = sbr.rel (%p171) target = $region20
        $region19: #{tamil_gpt_forward.5} parent=11 // pred_region
          _
        $region20: #{tamil_gpt_forward.5} parent=11 // pred_fallthru
          _
        // Predicated region
        $region21: #{tamil_gpt_forward.5} parent=11 // pred_check
          %p174 = pneg %p93
        $region22: #{tamil_gpt_forward.5} parent=11 // pred_check_branch
          %176 = sbr.rel (%p174) target = $region24
        $region23: #{tamil_gpt_forward.5} parent=11 // pred_region
          _
        $region24: #{tamil_gpt_forward.5} parent=11 // pred_fallthru
          _
      $region12: #{tamil_gpt_forward.5} parent=5 // pred_fallthru
        _
      %p177 = scmp.lt.s32.totalorder %s13, 2
      // Predicated region
      $region25: #{tamil_gpt_forward.5} parent=5 // pred_check
        %p178 = pneg %p177
      $region26: #{tamil_gpt_forward.5} parent=5 // pred_check_branch
        %180 = sbr.rel (%p178) target = $region28
      $region27: #{tamil_gpt_forward.5} parent=5 // pred_region
        // Predicated region
        $region29: #{tamil_gpt_forward.5} parent=27 // pred_check
          %p181 = pneg %p113
        $region30: #{tamil_gpt_forward.5} parent=27 // pred_check_branch
          %183 = sbr.rel (%p181) target = $region32
        $region31: #{tamil_gpt_forward.5} parent=27 // pred_region
          %s184 = smul.u32 16, %s21
          %p185 = scmp.lt.s32.totalorder %s184, 31
          %s186 = scalar_select %p185, %s184, 31
          %s187 = smul.addr %s186, 8
          %s188 = scalar_lea.vmem %s3, %s187
          %s189 = smul.u32 16, %s21
        $region32: #{tamil_gpt_forward.5} parent=27 // pred_fallthru
          _
      $region28: #{tamil_gpt_forward.5} parent=5 // pred_fallthru
        _
      %p190 = scmp.le.s32.totalorder 1, %s13
      %p191 = scmp.lt.s32.totalorder %s13, 3
      %p192 = pnand %p190, %p191
      %p193 = pneg %p192
      // Predicated region
      $region33: #{tamil_gpt_forward.5} parent=5 // pred_check
        _
      $region34: #{tamil_gpt_forward.5} parent=5 // pred_check_branch
        %195 = sbr.rel (%p192) target = $region36
      $region35: #{tamil_gpt_forward.5} parent=5 // pred_region
        %s196 = ssub.s32 %s13, 1
        %s197 = smul.u32 4, %s22
        %p198 = scmp.lt.s32.totalorder %s197, 3
        %s199 = scalar_select %p198, %s197, 3
        %s200 = smul.addr %s199, 8
        %s201 = scalar_lea.vmem %s0, %s200
        %p202 = pneg %p51
        %p203 = pneg %p48
        %p204 = pneg %p72
        %p205 = pneg %p69
        %p206 = pneg %p93
        %p207 = pneg %p90
        %s208 = smul.u32 16, %s23
        %p209 = scmp.lt.s32.totalorder %s208, 31
        %s210 = scalar_select %p209, %s208, 31
        %s211 = smul.addr %s210, 8
        %s212 = scalar_lea.vmem %s3, %s211
        %p213 = pneg %p119
        %p214 = pneg %p116
        %p215 = pneg %p147
        %p216 = pneg %p144
        %s217 = sand.u32 %s134, 1
        %s218 = scalar_lea.sflag [#allocation3], %s217
        %s219 = sand.u32 %s134, 1
        %s220 = smul.addr %s219, 32
        %s221 = scalar_lea.vmem [#allocation2], %s220
        %s222 = smul.u32 4, %s22
        %p223 = scmp.lt.s32.totalorder %s222, 3
        %s224 = scalar_select %p223, %s222, 3
        %s225 = smul.addr %s224, 8
        %s226 = scalar_lea.vmem %s0, %s225
        %s227 = smul.u32 4, %s22
        %s228 = smul.u32 16, %s23
        %p229 = scmp.lt.s32.totalorder %s228, 31
        %s230 = scalar_select %p229, %s228, 31
        %s231 = smul.addr %s230, 8
        %s232 = scalar_lea.vmem %s3, %s231
        %s233 = smul.u32 16, %s23
        %s234 = smul.u32 4, %s22
        %v235 = vld [vmem:[%s226] sm:$0xff]
        %v236 = vld [vmem:[%s226 + $0x8] sm:$0xff]
        %v237 = vld [vmem:[%s226 + $0x10] sm:$0xff]
        %v238 = vld [vmem:[%s226 + $0x18] sm:$0xff]
        %v239 = vld [vmem:[%s1] sm:$0x1]
        %v240 = vld [vmem:[%s2] sm:$0x1]
        %vm241 = vcmask 523264
        %v242 = vsel %vm241, %v235, 0.0
        %243 = vadd.xlane.f32.xlu0 %v242
        %v244 = vpop.xlane.xlu0 %243
        %v245 = vsel %vm241, %v236, 0.0
        %246 = vadd.xlane.f32.xlu0 %v245
        %v247 = vpop.xlane.xlu0 %246
        %v248 = vsel %vm241, %v237, 0.0
        %249 = vadd.xlane.f32.xlu0 %v248
        %v250 = vpop.xlane.xlu0 %249
        %v251 = vsel %vm241, %v238, 0.0
        %252 = vadd.xlane.f32.xlu0 %v251
        %v253 = vpop.xlane.xlu0 %252
        %v254 = vrcp.pop 64.0
        %v255 = vmul.f32 64.0, %v254
        %v256 = vsub.f32 1.0, %v255
        %v257 = vmul.f32 %v254, %v256
        %v258 = vadd.f32 %v254, %v257
        %vm259 = vweird.f32 %v254
        %v260 = vsel %vm259, %v254, %v258
        %v261 = vmul.f32 %v244, %v260
        %v262 = vmul.f32 %v247, %v260
        %v263 = vmul.f32 %v250, %v260
        %v264 = vmul.f32 %v253, %v260
        %v265 = vsub.f32 %v235, %v261
        %v266 = vsub.f32 %v236, %v262
        %v267 = vsub.f32 %v237, %v263
        %v268 = vsub.f32 %v238, %v264
        %v269 = vmul.f32 %v265, %v265
        %v270 = vmul.f32 %v266, %v266
        %v271 = vmul.f32 %v267, %v267
        %v272 = vmul.f32 %v268, %v268
        %v273 = vsel %vm241, %v269, 0.0
        %274 = vadd.xlane.f32.xlu0 %v273
        %v275 = vpop.xlane.xlu0 %274
        %v276 = vsel %vm241, %v270, 0.0
        %277 = vadd.xlane.f32.xlu0 %v276
        %v278 = vpop.xlane.xlu0 %277
        %v279 = vsel %vm241, %v271, 0.0
        %280 = vadd.xlane.f32.xlu0 %v279
        %v281 = vpop.xlane.xlu0 %280
        %v282 = vsel %vm241, %v272, 0.0
        %283 = vadd.xlane.f32.xlu0 %v282
        %v284 = vpop.xlane.xlu0 %283
        %v285 = vmul.f32 %v275, %v260
        %v286 = vmul.f32 %v278, %v260
        %v287 = vmul.f32 %v281, %v260
        %v288 = vmul.f32 %v284, %v260
        %v289 = vadd.f32 %v285, 1e-05
        %v290 = vadd.f32 %v286, 1e-05
        %v291 = vadd.f32 %v287, 1e-05
        %v292 = vadd.f32 %v288, 1e-05
        %v293 = vrsqrt.pop %v289
        %v294 = vmul.f32 %v293, %v289
        %v295 = vmul.f32 %v294, %v293
        %v296 = vmul.f32 0.5, %v295
        %v297 = vsub.f32 1.5, %v296
        %v298 = vmul.f32 %v293, %v297
        %vm299 = vweird.f32 %v289
        %vm300 = vweird.f32 %v293
        %vm301 = vmor %vm299, %vm300
        %v302 = vsel %vm301, %v293, %v298
        %v303 = vrsqrt.pop %v290
        %v304 = vmul.f32 %v303, %v290
        %v305 = vmul.f32 %v304, %v303
        %v306 = vmul.f32 0.5, %v305
        %v307 = vsub.f32 1.5, %v306
        %v308 = vmul.f32 %v303, %v307
        %vm309 = vweird.f32 %v290
        %vm310 = vweird.f32 %v303
        %vm311 = vmor %vm309, %vm310
        %v312 = vsel %vm311, %v303, %v308
        %v313 = vrsqrt.pop %v291
        %v314 = vmul.f32 %v313, %v291
        %v315 = vmul.f32 %v314, %v313
        %v316 = vmul.f32 0.5, %v315
        %v317 = vsub.f32 1.5, %v316
        %v318 = vmul.f32 %v313, %v317
        %vm319 = vweird.f32 %v291
        %vm320 = vweird.f32 %v313
        %vm321 = vmor %vm319, %vm320
        %v322 = vsel %vm321, %v313, %v318
        %v323 = vrsqrt.pop %v292
        %v324 = vmul.f32 %v323, %v292
        %v325 = vmul.f32 %v324, %v323
        %v326 = vmul.f32 0.5, %v325
        %v327 = vsub.f32 1.5, %v326
        %v328 = vmul.f32 %v323, %v327
        %vm329 = vweird.f32 %v292
        %vm330 = vweird.f32 %v323
        %vm331 = vmor %vm329, %vm330
        %v332 = vsel %vm331, %v323, %v328
        %v333 = vmul.f32 %v265, %v302
        %v334 = vmul.f32 %v266, %v312
        %v335 = vmul.f32 %v267, %v322
        %v336 = vmul.f32 %v268, %v332
        %v338 = vperm.slane %v239, 0
        %v340 = vmul.f32 %v333, %v338
        %v341 = vmul.f32 %v334, %v338
        %v342 = vmul.f32 %v335, %v338
        %v343 = vmul.f32 %v336, %v338
        %v345 = vperm.slane %v240, 0
        %v347 = vadd.f32 %v340, %v345
        %v348 = vadd.f32 %v341, %v345
        %v349 = vadd.f32 %v342, %v345
        %v350 = vadd.f32 %v343, %v345
        %v351 = vpack.c.bf16 %v348, %v347
        %v352 = vpack.c.bf16 %v350, %v349
        %v353 = vld [vmem:[%s232] sm:$0xff]
        %v354 = vld [vmem:[%s232 + $0x8] sm:$0xff]
        %v355 = vld [vmem:[%s232 + $0x10] sm:$0xff]
        %v356 = vld [vmem:[%s232 + $0x18] sm:$0xff]
        %v357 = vld [vmem:[%s232 + $0x20] sm:$0xff]
        %v358 = vld [vmem:[%s232 + $0x28] sm:$0xff]
        %v359 = vld [vmem:[%s232 + $0x30] sm:$0xff]
        %v360 = vld [vmem:[%s232 + $0x38] sm:$0xff]
        %v361 = vld [vmem:[%s232 + $0x40] sm:$0xff]
        %v362 = vld [vmem:[%s232 + $0x48] sm:$0xff]
        %v363 = vld [vmem:[%s232 + $0x50] sm:$0xff]
        %v364 = vld [vmem:[%s232 + $0x58] sm:$0xff]
        %v365 = vld [vmem:[%s232 + $0x60] sm:$0xff]
        %v366 = vld [vmem:[%s232 + $0x68] sm:$0xff]
        %v367 = vld [vmem:[%s232 + $0x70] sm:$0xff]
        %v368 = vld [vmem:[%s232 + $0x78] sm:$0xff]
        %v369 = vpack.c.bf16 %v354, %v353
        %v370 = vpack.c.bf16 %v356, %v355
        %v371 = vpack.c.bf16 %v358, %v357
        %v372 = vpack.c.bf16 %v360, %v359
        %v373 = vpack.c.bf16 %v362, %v361
        %v374 = vpack.c.bf16 %v364, %v363
        %v375 = vpack.c.bf16 %v366, %v365
        %v376 = vpack.c.bf16 %v368, %v367
        %v378 = vsel %vm241, %v351, 0
        %v381 = vsel %vm241, %v352, 0
        %v384 = vsel %vm241, %v369, 0
        %v387 = vsel %vm241, %v370, 0
        %v390 = vsel %vm241, %v371, 0
        %v393 = vsel %vm241, %v372, 0
        %v396 = vsel %vm241, %v373, 0
        %v399 = vsel %vm241, %v374, 0
        %v402 = vsel %vm241, %v375, 0
        %v405 = vsel %vm241, %v376, 0
        %407 = vmatpush.bf16.xpose.msra.mxu0 %v405
        %408 = vmatpush.bf16.xpose.msra.mxu0 %v402
        %409 = vmatpush.bf16.xpose.msra.mxu0 %v399
        %410 = vmatpush.bf16.xpose.msra.mxu0 %v396
        %411 = vmatpush.bf16.xpose.msra.mxu0 %v393
        %412 = vmatpush.bf16.xpose.msra.mxu0 %v390
        %413 = vmatpush.bf16.xpose.msra.mxu0 %v387
        %414 = vmatpush.bf16.xpose.msra.mxu0 %v384
        %415 = vmatmul.bf16.gmra.mxu0 %v378
        %v416 = vpop.f32.mrf.mxu0
        %v417 = vadd.f32 0.0, %v416
        %v418 = vpop.f32.mrf.mxu0
        %v419 = vadd.f32 0.0, %v418
        %420 = vmatmul.bf16.gmra.mxu0 %v381
        %v421 = vpop.f32.mrf.mxu0
        %v422 = vadd.f32 0.0, %v421
        %v423 = vpop.f32.mrf.mxu0
        %v424 = vadd.f32 0.0, %v423
        %425 = vdwg.mxu0
        %426 = vst [vmem:[%s221] sm:$0xff] %v417
        %427 = vst [vmem:[%s221 + $0x8] sm:$0xff] %v419
        %428 = vst [vmem:[%s221 + $0x10] sm:$0xff] %v422
        %429 = vst [vmem:[%s221 + $0x18] sm:$0xff] %v424
        %s430 = sand.u32 %s134, 1
        %s431 = scalar_lea.sflag [#allocation3], %s430
        %s432 = sand.u32 %s134, 1
        %s433 = smul.addr %s432, 32
        %s434 = scalar_lea.vmem [#allocation2], %s433
        // Predicated region
        $region37: #{tamil_gpt_forward.5} parent=35 // pred_check
          %p435 = pneg %p144
        $region38: #{tamil_gpt_forward.5} parent=35 // pred_check_branch
          %437 = sbr.rel (%p435) target = $region40
        $region39: #{tamil_gpt_forward.5} parent=35 // pred_region
          %s438 = smul.u32 4, %s22
          %440 = vsyncadd %s431, 0
          %s441 = smul.addr %s438, 2
          %s442 = sadd.s32 %s23, %s441
          %s443 = smul.addr %s442, 8
          %s444 = scalar_lea.hbm %s4, %s443
          %s445 = sshll.u32 %s434, 4
          %s446 = int_to_ptr.vmem [resolvable:$true] %s445
          %s447 = sshll.u32 %s444, 4
          %s448 = int_to_ptr.hbm [resolvable:$true] %s447
          %453 = dma.vmem_to_hbm [thread:$0]  %s446, 512, %s448, %s431, 128, 256, 8
        $region40: #{tamil_gpt_forward.5} parent=35 // pred_fallthru
          _
      $region36: #{tamil_gpt_forward.5} parent=5 // pred_fallthru
        _
      %p454 = scmp.le.s32.totalorder 2, %s13
      // Predicated region
      $region41: #{tamil_gpt_forward.5} parent=5 // pred_check
        %p455 = pneg %p454
      $region42: #{tamil_gpt_forward.5} parent=5 // pred_check_branch
        %457 = sbr.rel (%p455) target = $region44
      $region43: #{tamil_gpt_forward.5} parent=5 // pred_region
        %s458 = ssub.s32 %s13, 2
        // Predicated region
        $region45: #{tamil_gpt_forward.5} parent=43 // pred_check
          %p459 = pneg %p150
        $region46: #{tamil_gpt_forward.5} parent=43 // pred_check_branch
          %461 = sbr.rel (%p459) target = $region48
        $region47: #{tamil_gpt_forward.5} parent=43 // pred_region
          %s462 = sand.u32 %s135, 1
          %s463 = scalar_lea.sflag [#allocation3], %s462
          %s464 = sand.u32 %s135, 1
          %s465 = smul.addr %s464, 32
          %s466 = scalar_lea.vmem [#allocation2], %s465
          %468 = dma.done %s463, 512
        $region48: #{tamil_gpt_forward.5} parent=43 // pred_fallthru
          _
      $region44: #{tamil_gpt_forward.5} parent=5 // pred_fallthru
        _
    $region6: #{tamil_gpt_forward.5} parent=1 // loop_footer
      %s17 = sadd.s32 1, %s13
    $region7: #{tamil_gpt_forward.5} parent=1 // loop_footer_branch
      %12 = sbr.rel target = $region3
    $region8: #{tamil_gpt_forward.5} parent=1 // loop_exit
      _
    %469 = vsyncpa [#allocation3], 1
    %s470 = scalar_lea.sflag [#allocation3], 1
    %471 = vsyncpa %s470, 1

// kernel: tamil_gpt_forward.3
$region0: #{tamil_gpt_forward.3}
  #allocation0 [shape = 'u32[]', space=smem, size = 0x4, offset = 0x4, fixed_abs, tag = 'smem constant byte address 0x4 - core index']
  #allocation1 [shape = 'u32[72,128]{1,0:T(1,128)}', space=vmem, size = 0x9000, scoped, tag = 'internal scratch']
  %s0 = inlined_call_operand.vmem [shape: f32[2,16,64], index: 0, kind: input, shape index: {}]
  %s1 = inlined_call_operand.vmem [shape: f32[1,64], index: 1, kind: input, shape index: {}]
  %s2 = inlined_call_operand.vmem [shape: f32[1,64], index: 2, kind: input, shape index: {}]
  %s3 = inlined_call_operand.vmem [shape: f32[64,192], index: 3, kind: input, shape index: {}]
  %s4 = inlined_call_operand.vmem [shape: f32[1,192], index: 4, kind: input, shape index: {}]
  %s5 = inlined_call_operand.vmem [shape: f32[64,64], index: 5, kind: input, shape index: {}]
  %s6 = inlined_call_operand.vmem [shape: f32[1,64], index: 6, kind: input, shape index: {}]
  %s7 = inlined_call_operand.vmem [shape: f32[1,64], index: 7, kind: input, shape index: {}]
  %s8 = inlined_call_operand.vmem [shape: f32[1,64], index: 8, kind: input, shape index: {}]
  %s9 = inlined_call_operand.vmem [shape: f32[64,256], index: 9, kind: input, shape index: {}]
  %s10 = inlined_call_operand.vmem [shape: f32[1,256], index: 10, kind: input, shape index: {}]
  %s11 = inlined_call_operand.vmem [shape: f32[256,64], index: 11, kind: input, shape index: {}]
  %s12 = inlined_call_operand.vmem [shape: f32[1,64], index: 12, kind: input, shape index: {}]
  %s13 = inlined_call_operand.vmem [shape: f32[2,16,64], index: 13, kind: output, shape index: {}]
  %s14 = sld [smem:[#allocation0]]
  $region85: #{tamil_gpt_forward.3} parent=0
    _
  %s16 = ssub.s32 1, %s14
  %s17 = scalar_select 0, %s16, %s14
  loop: start=0, step=1, limit=4
  $region2: #{tamil_gpt_forward.3} parent=0 // loop_pre_header
    _
  $region3: #{tamil_gpt_forward.3} parent=0 // loop_header
    %s19 = sphi 0, %s23
    %p20 = scmp.ge.s32.totalorder %s19, 4
    %s29 = sphi 0, %s31
    %s32 = sphi 0, %s29
    %s33 = sphi 0, %s32
    %s49 = sphi 0, %s33
    %s53 = sphi 0, %s53
    %s55 = sphi 0, %s53
    %s56 = sphi 0, %s55
    %s70 = sphi 0, %s56
    %s74 = sphi 0, %s74
    %s76 = sphi 0, %s74
    %s77 = sphi 0, %s76
    %s91 = sphi 0, %s77
    %s95 = sphi 0, %s95
    %s97 = sphi 0, %s95
    %s98 = sphi 0, %s97
    %s112 = sphi 0, %s98
    %s116 = sphi 0, %s116
    %s118 = sphi 0, %s116
    %s119 = sphi 0, %s118
    %s133 = sphi 0, %s119
    %s137 = sphi 0, %s137
    %s139 = sphi 0, %s137
    %s140 = sphi 0, %s139
    %s154 = sphi 0, %s140
    %s158 = sphi 0, %s158
    %s160 = sphi 0, %s158
    %s161 = sphi 0, %s160
    %s175 = sphi 0, %s161
    %s179 = sphi 0, %s179
    %s181 = sphi 0, %s179
    %s182 = sphi 0, %s181
    %s196 = sphi 0, %s182
    %s200 = sphi 0, %s200
    %s202 = sphi 0, %s200
    %s203 = sphi 0, %s202
    %s217 = sphi 0, %s203
    %s221 = sphi 0, %s221
    %s223 = sphi 0, %s221
    %s224 = sphi 0, %s223
    %s238 = sphi 0, %s224
    %s242 = sphi 0, %s242
    %s244 = sphi 0, %s242
    %s245 = sphi 0, %s244
    %s259 = sphi 0, %s245
    %s263 = sphi 0, %s263
    %s265 = sphi 0, %s263
    %s266 = sphi 0, %s265
    %s280 = sphi 0, %s266
    %s284 = sphi 0, %s284
    %s286 = sphi 0, %s284
    %s287 = sphi 0, %s286
    %s301 = sphi 0, %s287
    %s307 = sphi 0, %s309
    %s310 = sphi 0, %s307
    %s311 = sphi 0, %s310
    %s327 = sphi 0, %s311
  $region4: #{tamil_gpt_forward.3} parent=0 // loop_header_branch
    %22 = sbr.rel (%p20) target = $region8
  $region5: #{tamil_gpt_forward.3} parent=0 // loop_body
    %s24 = ssub.s32 %s19, 1
    %s25 = ssub.s32 %s19, 2
    %s26 = sadd.s32 %s19, 1
    %s27 = ssub.s32 %s19, %s26
    %p28 = scmp.eq.s32.totalorder %s27, 0
    %s30 = sadd.s32 %s29, 1
    %s31 = scalar_select %p28, %s29, %s30
    %p34 = pneg %p28
    %p35 = scmp.eq.s32.totalorder %s19, 1
    %p36 = por %p34, %p35
    %p37 = scmp.ne.s32.totalorder %s29, %s32
    %p38 = scmp.eq.s32.totalorder %s19, 0
    %p39 = por %p37, %p38
    %p40 = scmp.ne.s32.totalorder %s29, %s32
    %p41 = scmp.eq.s32.totalorder %s24, 1
    %p42 = por %p40, %p41
    %p43 = scmp.ne.s32.totalorder %s32, %s33
    %p44 = scmp.eq.s32.totalorder %s24, 0
    %p45 = por %p43, %p44
    %p46 = scmp.ne.s32.totalorder %s32, %s33
    %p47 = scmp.eq.s32.totalorder %s25, 1
    %p48 = por %p46, %p47
    %p50 = scmp.ne.s32.totalorder %s33, %s49
    %p51 = scmp.eq.s32.totalorder %s25, 0
    %p52 = por %p50, %p51
    %s54 = sadd.s32 %s53, 1
    %p57 = scmp.eq.s32.totalorder %s19, 1
    %p58 = scmp.ne.s32.totalorder %s53, %s55
    %p59 = scmp.eq.s32.totalorder %s19, 0
    %p60 = por %p58, %p59
    %p61 = scmp.ne.s32.totalorder %s53, %s55
    %p62 = scmp.eq.s32.totalorder %s24, 1
    %p63 = por %p61, %p62
    %p64 = scmp.ne.s32.totalorder %s55, %s56
    %p65 = scmp.eq.s32.totalorder %s24, 0
    %p66 = por %p64, %p65
    %p67 = scmp.ne.s32.totalorder %s55, %s56
    %p68 = scmp.eq.s32.totalorder %s25, 1
    %p69 = por %p67, %p68
    %p71 = scmp.ne.s32.totalorder %s56, %s70
    %p72 = scmp.eq.s32.totalorder %s25, 0
    %p73 = por %p71, %p72
    %s75 = sadd.s32 %s74, 1
    %p78 = scmp.eq.s32.totalorder %s19, 1
    %p79 = scmp.ne.s32.totalorder %s74, %s76
    %p80 = scmp.eq.s32.totalorder %s19, 0
    %p81 = por %p79, %p80
    %p82 = scmp.ne.s32.totalorder %s74, %s76
    %p83 = scmp.eq.s32.totalorder %s24, 1
    %p84 = por %p82, %p83
    %p85 = scmp.ne.s32.totalorder %s76, %s77
    %p86 = scmp.eq.s32.totalorder %s24, 0
    %p87 = por %p85, %p86
    %p88 = scmp.ne.s32.totalorder %s76, %s77
    %p89 = scmp.eq.s32.totalorder %s25, 1
    %p90 = por %p88, %p89
    %p92 = scmp.ne.s32.totalorder %s77, %s91
    %p93 = scmp.eq.s32.totalorder %s25, 0
    %p94 = por %p92, %p93
    %s96 = sadd.s32 %s95, 1
    %p99 = scmp.eq.s32.totalorder %s19, 1
    %p100 = scmp.ne.s32.totalorder %s95, %s97
    %p101 = scmp.eq.s32.totalorder %s19, 0
    %p102 = por %p100, %p101
    %p103 = scmp.ne.s32.totalorder %s95, %s97
    %p104 = scmp.eq.s32.totalorder %s24, 1
    %p105 = por %p103, %p104
    %p106 = scmp.ne.s32.totalorder %s97, %s98
    %p107 = scmp.eq.s32.totalorder %s24, 0
    %p108 = por %p106, %p107
    %p109 = scmp.ne.s32.totalorder %s97, %s98
    %p110 = scmp.eq.s32.totalorder %s25, 1
    %p111 = por %p109, %p110
    %p113 = scmp.ne.s32.totalorder %s98, %s112
    %p114 = scmp.eq.s32.totalorder %s25, 0
    %p115 = por %p113, %p114
    %s117 = sadd.s32 %s116, 1
    %p120 = scmp.eq.s32.totalorder %s19, 1
    %p121 = scmp.ne.s32.totalorder %s116, %s118
    %p122 = scmp.eq.s32.totalorder %s19, 0
    %p123 = por %p121, %p122
    %p124 = scmp.ne.s32.totalorder %s116, %s118
    %p125 = scmp.eq.s32.totalorder %s24, 1
    %p126 = por %p124, %p125
    %p127 = scmp.ne.s32.totalorder %s118, %s119
    %p128 = scmp.eq.s32.totalorder %s24, 0
    %p129 = por %p127, %p128
    %p130 = scmp.ne.s32.totalorder %s118, %s119
    %p131 = scmp.eq.s32.totalorder %s25, 1
    %p132 = por %p130, %p131
    %p134 = scmp.ne.s32.totalorder %s119, %s133
    %p135 = scmp.eq.s32.totalorder %s25, 0
    %p136 = por %p134, %p135
    %s138 = sadd.s32 %s137, 1
    %p141 = scmp.eq.s32.totalorder %s19, 1
    %p142 = scmp.ne.s32.totalorder %s137, %s139
    %p143 = scmp.eq.s32.totalorder %s19, 0
    %p144 = por %p142, %p143
    %p145 = scmp.ne.s32.totalorder %s137, %s139
    %p146 = scmp.eq.s32.totalorder %s24, 1
    %p147 = por %p145, %p146
    %p148 = scmp.ne.s32.totalorder %s139, %s140
    %p149 = scmp.eq.s32.totalorder %s24, 0
    %p150 = por %p148, %p149
    %p151 = scmp.ne.s32.totalorder %s139, %s140
    %p152 = scmp.eq.s32.totalorder %s25, 1
    %p153 = por %p151, %p152
    %p155 = scmp.ne.s32.totalorder %s140, %s154
    %p156 = scmp.eq.s32.totalorder %s25, 0
    %p157 = por %p155, %p156
    %s159 = sadd.s32 %s158, 1
    %p162 = scmp.eq.s32.totalorder %s19, 1
    %p163 = scmp.ne.s32.totalorder %s158, %s160
    %p164 = scmp.eq.s32.totalorder %s19, 0
    %p165 = por %p163, %p164
    %p166 = scmp.ne.s32.totalorder %s158, %s160
    %p167 = scmp.eq.s32.totalorder %s24, 1
    %p168 = por %p166, %p167
    %p169 = scmp.ne.s32.totalorder %s160, %s161
    %p170 = scmp.eq.s32.totalorder %s24, 0
    %p171 = por %p169, %p170
    %p172 = scmp.ne.s32.totalorder %s160, %s161
    %p173 = scmp.eq.s32.totalorder %s25, 1
    %p174 = por %p172, %p173
    %p176 = scmp.ne.s32.totalorder %s161, %s175
    %p177 = scmp.eq.s32.totalorder %s25, 0
    %p178 = por %p176, %p177
    %s180 = sadd.s32 %s179, 1
    %p183 = scmp.eq.s32.totalorder %s19, 1
    %p184 = scmp.ne.s32.totalorder %s179, %s181
    %p185 = scmp.eq.s32.totalorder %s19, 0
    %p186 = por %p184, %p185
    %p187 = scmp.ne.s32.totalorder %s179, %s181
    %p188 = scmp.eq.s32.totalorder %s24, 1
    %p189 = por %p187, %p188
    %p190 = scmp.ne.s32.totalorder %s181, %s182
    %p191 = scmp.eq.s32.totalorder %s24, 0
    %p192 = por %p190, %p191
    %p193 = scmp.ne.s32.totalorder %s181, %s182
    %p194 = scmp.eq.s32.totalorder %s25, 1
    %p195 = por %p193, %p194
    %p197 = scmp.ne.s32.totalorder %s182, %s196
    %p198 = scmp.eq.s32.totalorder %s25, 0
    %p199 = por %p197, %p198
    %s201 = sadd.s32 %s200, 1
    %p204 = scmp.eq.s32.totalorder %s19, 1
    %p205 = scmp.ne.s32.totalorder %s200, %s202
    %p206 = scmp.eq.s32.totalorder %s19, 0
    %p207 = por %p205, %p206
    %p208 = scmp.ne.s32.totalorder %s200, %s202
    %p209 = scmp.eq.s32.totalorder %s24, 1
    %p210 = por %p208, %p209
    %p211 = scmp.ne.s32.totalorder %s202, %s203
    %p212 = scmp.eq.s32.totalorder %s24, 0
    %p213 = por %p211, %p212
    %p214 = scmp.ne.s32.totalorder %s202, %s203
    %p215 = scmp.eq.s32.totalorder %s25, 1
    %p216 = por %p214, %p215
    %p218 = scmp.ne.s32.totalorder %s203, %s217
    %p219 = scmp.eq.s32.totalorder %s25, 0
    %p220 = por %p218, %p219
    %s222 = sadd.s32 %s221, 1
    %p225 = scmp.eq.s32.totalorder %s19, 1
    %p226 = scmp.ne.s32.totalorder %s221, %s223
    %p227 = scmp.eq.s32.totalorder %s19, 0
    %p228 = por %p226, %p227
    %p229 = scmp.ne.s32.totalorder %s221, %s223
    %p230 = scmp.eq.s32.totalorder %s24, 1
    %p231 = por %p229, %p230
    %p232 = scmp.ne.s32.totalorder %s223, %s224
    %p233 = scmp.eq.s32.totalorder %s24, 0
    %p234 = por %p232, %p233
    %p235 = scmp.ne.s32.totalorder %s223, %s224
    %p236 = scmp.eq.s32.totalorder %s25, 1
    %p237 = por %p235, %p236
    %p239 = scmp.ne.s32.totalorder %s224, %s238
    %p240 = scmp.eq.s32.totalorder %s25, 0
    %p241 = por %p239, %p240
    %s243 = sadd.s32 %s242, 1
    %p246 = scmp.eq.s32.totalorder %s19, 1
    %p247 = scmp.ne.s32.totalorder %s242, %s244
    %p248 = scmp.eq.s32.totalorder %s19, 0
    %p249 = por %p247, %p248
    %p250 = scmp.ne.s32.totalorder %s242, %s244
    %p251 = scmp.eq.s32.totalorder %s24, 1
    %p252 = por %p250, %p251
    %p253 = scmp.ne.s32.totalorder %s244, %s245
    %p254 = scmp.eq.s32.totalorder %s24, 0
    %p255 = por %p253, %p254
    %p256 = scmp.ne.s32.totalorder %s244, %s245
    %p257 = scmp.eq.s32.totalorder %s25, 1
    %p258 = por %p256, %p257
    %p260 = scmp.ne.s32.totalorder %s245, %s259
    %p261 = scmp.eq.s32.totalorder %s25, 0
    %p262 = por %p260, %p261
    %s264 = sadd.s32 %s263, 1
    %p267 = scmp.eq.s32.totalorder %s19, 1
    %p268 = scmp.ne.s32.totalorder %s263, %s265
    %p269 = scmp.eq.s32.totalorder %s19, 0
    %p270 = por %p268, %p269
    %p271 = scmp.ne.s32.totalorder %s263, %s265
    %p272 = scmp.eq.s32.totalorder %s24, 1
    %p273 = por %p271, %p272
    %p274 = scmp.ne.s32.totalorder %s265, %s266
    %p275 = scmp.eq.s32.totalorder %s24, 0
    %p276 = por %p274, %p275
    %p277 = scmp.ne.s32.totalorder %s265, %s266
    %p278 = scmp.eq.s32.totalorder %s25, 1
    %p279 = por %p277, %p278
    %p281 = scmp.ne.s32.totalorder %s266, %s280
    %p282 = scmp.eq.s32.totalorder %s25, 0
    %p283 = por %p281, %p282
    %s285 = sadd.s32 %s284, 1
    %p288 = scmp.eq.s32.totalorder %s19, 1
    %p289 = scmp.ne.s32.totalorder %s284, %s286
    %p290 = scmp.eq.s32.totalorder %s19, 0
    %p291 = por %p289, %p290
    %p292 = scmp.ne.s32.totalorder %s284, %s286
    %p293 = scmp.eq.s32.totalorder %s24, 1
    %p294 = por %p292, %p293
    %p295 = scmp.ne.s32.totalorder %s286, %s287
    %p296 = scmp.eq.s32.totalorder %s24, 0
    %p297 = por %p295, %p296
    %p298 = scmp.ne.s32.totalorder %s286, %s287
    %p299 = scmp.eq.s32.totalorder %s25, 1
    %p300 = por %p298, %p299
    %p302 = scmp.ne.s32.totalorder %s287, %s301
    %p303 = scmp.eq.s32.totalorder %s25, 0
    %p304 = por %p302, %p303
    %s305 = ssub.s32 %s19, %s26
    %p306 = scmp.eq.s32.totalorder %s305, 0
    %s308 = sadd.s32 %s307, 1
    %s309 = scalar_select %p306, %s307, %s308
    %p312 = pneg %p306
    %p313 = scmp.eq.s32.totalorder %s19, 1
    %p314 = por %p312, %p313
    %p315 = scmp.ne.s32.totalorder %s307, %s310
    %p316 = scmp.eq.s32.totalorder %s19, 0
    %p317 = por %p315, %p316
    %p318 = scmp.ne.s32.totalorder %s307, %s310
    %p319 = scmp.eq.s32.totalorder %s24, 1
    %p320 = por %p318, %p319
    %p321 = scmp.ne.s32.totalorder %s310, %s311
    %p322 = scmp.eq.s32.totalorder %s24, 0
    %p323 = por %p321, %p322
    %p324 = scmp.ne.s32.totalorder %s310, %s311
    %p325 = scmp.eq.s32.totalorder %s25, 1
    %p326 = por %p324, %p325
    %p328 = scmp.ne.s32.totalorder %s311, %s327
    %p329 = scmp.eq.s32.totalorder %s25, 0
    %p330 = por %p328, %p329
    %p331 = scmp.le.s32.totalorder 1, %s19
    %p332 = scmp.lt.s32.totalorder %s19, 3
    %p333 = pnand %p331, %p332
    %p334 = pneg %p333
    // Predicated region
    $region9: #{tamil_gpt_forward.3} parent=5 // pred_check
      _
    $region10: #{tamil_gpt_forward.3} parent=5 // pred_check_branch
      %336 = sbr.rel (%p333) target = $region12
    $region11: #{tamil_gpt_forward.3} parent=5 // pred_region
      %s337 = ssub.s32 %s19, 1
      // Predicated region
      $region13: #{tamil_gpt_forward.3} parent=11 // pred_check
        %p338 = pneg %p66
      $region14: #{tamil_gpt_forward.3} parent=11 // pred_check_branch
        %340 = sbr.rel (%p338) target = $region16
      $region15: #{tamil_gpt_forward.3} parent=11 // pred_region
        _
      $region16: #{tamil_gpt_forward.3} parent=11 // pred_fallthru
        _
      // Predicated region
      $region17: #{tamil_gpt_forward.3} parent=11 // pred_check
        %p341 = pneg %p87
      $region18: #{tamil_gpt_forward.3} parent=11 // pred_check_branch
        %343 = sbr.rel (%p341) target = $region20
      $region19: #{tamil_gpt_forward.3} parent=11 // pred_region
        _
      $region20: #{tamil_gpt_forward.3} parent=11 // pred_fallthru
        _
      // Predicated region
      $region21: #{tamil_gpt_forward.3} parent=11 // pred_check
        %p344 = pneg %p108
      $region22: #{tamil_gpt_forward.3} parent=11 // pred_check_branch
        %346 = sbr.rel (%p344) target = $region24
      $region23: #{tamil_gpt_forward.3} parent=11 // pred_region
        _
      $region24: #{tamil_gpt_forward.3} parent=11 // pred_fallthru
        _
      // Predicated region
      $region25: #{tamil_gpt_forward.3} parent=11 // pred_check
        %p347 = pneg %p129
      $region26: #{tamil_gpt_forward.3} parent=11 // pred_check_branch
        %349 = sbr.rel (%p347) target = $region28
      $region27: #{tamil_gpt_forward.3} parent=11 // pred_region
        _
      $region28: #{tamil_gpt_forward.3} parent=11 // pred_fallthru
        _
      // Predicated region
      $region29: #{tamil_gpt_forward.3} parent=11 // pred_check
        %p350 = pneg %p150
      $region30: #{tamil_gpt_forward.3} parent=11 // pred_check_branch
        %352 = sbr.rel (%p350) target = $region32
      $region31: #{tamil_gpt_forward.3} parent=11 // pred_region
        _
      $region32: #{tamil_gpt_forward.3} parent=11 // pred_fallthru
        _
      // Predicated region
      $region33: #{tamil_gpt_forward.3} parent=11 // pred_check
        %p353 = pneg %p171
      $region34: #{tamil_gpt_forward.3} parent=11 // pred_check_branch
        %355 = sbr.rel (%p353) target = $region36
      $region35: #{tamil_gpt_forward.3} parent=11 // pred_region
        _
      $region36: #{tamil_gpt_forward.3} parent=11 // pred_fallthru
        _
      // Predicated region
      $region37: #{tamil_gpt_forward.3} parent=11 // pred_check
        %p356 = pneg %p192
      $region38: #{tamil_gpt_forward.3} parent=11 // pred_check_branch
        %358 = sbr.rel (%p356) target = $region40
      $region39: #{tamil_gpt_forward.3} parent=11 // pred_region
        _
      $region40: #{tamil_gpt_forward.3} parent=11 // pred_fallthru
        _
      // Predicated region
      $region41: #{tamil_gpt_forward.3} parent=11 // pred_check
        %p359 = pneg %p213
      $region42: #{tamil_gpt_forward.3} parent=11 // pred_check_branch
        %361 = sbr.rel (%p359) target = $region44
      $region43: #{tamil_gpt_forward.3} parent=11 // pred_region
        _
      $region44: #{tamil_gpt_forward.3} parent=11 // pred_fallthru
        _
      // Predicated region
      $region45: #{tamil_gpt_forward.3} parent=11 // pred_check
        %p362 = pneg %p234
      $region46: #{tamil_gpt_forward.3} parent=11 // pred_check_branch
        %364 = sbr.rel (%p362) target = $region48
      $region47: #{tamil_gpt_forward.3} parent=11 // pred_region
        _
      $region48: #{tamil_gpt_forward.3} parent=11 // pred_fallthru
        _
      // Predicated region
      $region49: #{tamil_gpt_forward.3} parent=11 // pred_check
        %p365 = pneg %p255
      $region50: #{tamil_gpt_forward.3} parent=11 // pred_check_branch
        %367 = sbr.rel (%p365) target = $region52
      $region51: #{tamil_gpt_forward.3} parent=11 // pred_region
        _
      $region52: #{tamil_gpt_forward.3} parent=11 // pred_fallthru
        _
      // Predicated region
      $region53: #{tamil_gpt_forward.3} parent=11 // pred_check
        %p368 = pneg %p276
      $region54: #{tamil_gpt_forward.3} parent=11 // pred_check_branch
        %370 = sbr.rel (%p368) target = $region56
      $region55: #{tamil_gpt_forward.3} parent=11 // pred_region
        _
      $region56: #{tamil_gpt_forward.3} parent=11 // pred_fallthru
        _
      // Predicated region
      $region57: #{tamil_gpt_forward.3} parent=11 // pred_check
        %p371 = pneg %p297
      $region58: #{tamil_gpt_forward.3} parent=11 // pred_check_branch
        %373 = sbr.rel (%p371) target = $region60
      $region59: #{tamil_gpt_forward.3} parent=11 // pred_region
        _
      $region60: #{tamil_gpt_forward.3} parent=11 // pred_fallthru
        _
    $region12: #{tamil_gpt_forward.3} parent=5 // pred_fallthru
      _
    %p374 = scmp.lt.s32.totalorder %s19, 2
    // Predicated region
    $region61: #{tamil_gpt_forward.3} parent=5 // pred_check
      %p375 = pneg %p374
    $region62: #{tamil_gpt_forward.3} parent=5 // pred_check_branch
      %377 = sbr.rel (%p375) target = $region64
    $region63: #{tamil_gpt_forward.3} parent=5 // pred_region
      // Predicated region
      $region65: #{tamil_gpt_forward.3} parent=63 // pred_check
        %p378 = pneg %p39
      $region66: #{tamil_gpt_forward.3} parent=63 // pred_check_branch
        %380 = sbr.rel (%p378) target = $region68
      $region67: #{tamil_gpt_forward.3} parent=63 // pred_region
        %p381 = scmp.lt.s32.totalorder %s19, 1
        %s382 = scalar_select %p381, %s19, 1
        %s383 = smul.addr %s382, 2
        %s384 = smul.addr %s383, 8
        %s385 = scalar_lea.vmem %s0, %s384
      $region68: #{tamil_gpt_forward.3} parent=63 // pred_fallthru
        _
    $region64: #{tamil_gpt_forward.3} parent=5 // pred_fallthru
      _
    %p386 = scmp.le.s32.totalorder 1, %s19
    %p387 = scmp.lt.s32.totalorder %s19, 3
    %p388 = pnand %p386, %p387
    %p389 = pneg %p388
    // Predicated region
    $region69: #{tamil_gpt_forward.3} parent=5 // pred_check
      _
    $region70: #{tamil_gpt_forward.3} parent=5 // pred_check_branch
      %391 = sbr.rel (%p388) target = $region72
    $region71: #{tamil_gpt_forward.3} parent=5 // pred_region
      %s392 = ssub.s32 %s19, 1
      %p393 = scmp.lt.s32.totalorder %s24, 1
      %s394 = scalar_select %p393, %s24, 1
      %s395 = smul.addr %s394, 2
      %s396 = smul.addr %s395, 8
      %s397 = scalar_lea.vmem %s0, %s396
      %p398 = pneg %p45
      %p399 = pneg %p42
      %p400 = pneg %p66
      %p401 = pneg %p63
      %p402 = pneg %p87
      %p403 = pneg %p84
      %p404 = pneg %p108
      %p405 = pneg %p105
      %p406 = pneg %p129
      %p407 = pneg %p126
      %p408 = pneg %p150
      %p409 = pneg %p147
      %p410 = pneg %p171
      %p411 = pneg %p168
      %p412 = pneg %p192
      %p413 = pneg %p189
      %p414 = pneg %p213
      %p415 = pneg %p210
      %p416 = pneg %p234
      %p417 = pneg %p231
      %p418 = pneg %p255
      %p419 = pneg %p252
      %p420 = pneg %p276
      %p421 = pneg %p273
      %p422 = pneg %p297
      %p423 = pneg %p294
      %p424 = pneg %p323
      %p425 = pneg %p320
      %p426 = scmp.lt.s32.totalorder %s24, 1
      %s427 = scalar_select %p426, %s24, 1
      %s428 = smul.addr %s427, 2
      %s429 = smul.addr %s428, 8
      %s430 = scalar_lea.vmem %s13, %s429
      %p431 = scmp.lt.s32.totalorder %s24, 1
      %s432 = scalar_select %p431, %s24, 1
      %s433 = smul.addr %s432, 2
      %s434 = smul.addr %s433, 8
      %s435 = scalar_lea.vmem %s0, %s434
      %p436 = scmp.lt.s32.totalorder %s24, 1
      %s437 = scalar_select %p436, %s24, 1
      %s438 = smul.addr %s437, 2
      %s439 = smul.addr %s438, 8
      %s440 = scalar_lea.vmem %s13, %s439
      %v442 = vld [vmem:[%s435] sm:$0xff]
      %v443 = vld [vmem:[%s435 + $0x8] sm:$0xff]
      %v444 = vld [vmem:[%s1] sm:$0x1]
      %v445 = vld [vmem:[%s2] sm:$0x1]
      %vm446 = vcmask 523264
      %v447 = vsel %vm446, %v442, 0.0
      %448 = vadd.xlane.f32.xlu0 %v447
      %v449 = vpop.xlane.xlu0 %448
      %v450 = vsel %vm446, %v443, 0.0
      %451 = vadd.xlane.f32.xlu0 %v450
      %v452 = vpop.xlane.xlu0 %451
      %v453 = vrcp.pop 64.0
      %v454 = vmul.f32 64.0, %v453
      %v455 = vsub.f32 1.0, %v454
      %v456 = vmul.f32 %v453, %v455
      %v457 = vadd.f32 %v453, %v456
      %vm458 = vweird.f32 %v453
      %v459 = vsel %vm458, %v453, %v457
      %v460 = vmul.f32 %v449, %v459
      %v461 = vmul.f32 %v452, %v459
      %v462 = vsub.f32 %v442, %v460
      %v463 = vsub.f32 %v443, %v461
      %v464 = vmul.f32 %v462, %v462
      %v465 = vmul.f32 %v463, %v463
      %v466 = vsel %vm446, %v464, 0.0
      %467 = vadd.xlane.f32.xlu0 %v466
      %v468 = vpop.xlane.xlu0 %467
      %v469 = vsel %vm446, %v465, 0.0
      %470 = vadd.xlane.f32.xlu0 %v469
      %v471 = vpop.xlane.xlu0 %470
      %v472 = vmul.f32 %v468, %v459
      %v473 = vmul.f32 %v471, %v459
      %v474 = vadd.f32 %v472, 1e-05
      %v475 = vadd.f32 %v473, 1e-05
      %v476 = vrsqrt.pop %v474
      %v477 = vmul.f32 %v476, %v474
      %v478 = vmul.f32 %v477, %v476
      %v479 = vmul.f32 0.5, %v478
      %v480 = vsub.f32 1.5, %v479
      %v481 = vmul.f32 %v476, %v480
      %vm482 = vweird.f32 %v474
      %vm483 = vweird.f32 %v476
      %vm484 = vmor %vm482, %vm483
      %v485 = vsel %vm484, %v476, %v481
      %v486 = vrsqrt.pop %v475
      %v487 = vmul.f32 %v486, %v475
      %v488 = vmul.f32 %v487, %v486
      %v489 = vmul.f32 0.5, %v488
      %v490 = vsub.f32 1.5, %v489
      %v491 = vmul.f32 %v486, %v490
      %vm492 = vweird.f32 %v475
      %vm493 = vweird.f32 %v486
      %vm494 = vmor %vm492, %vm493
      %v495 = vsel %vm494, %v486, %v491
      %v496 = vmul.f32 %v462, %v485
      %v497 = vmul.f32 %v463, %v495
      %v499 = vperm.slane %v444, 0
      %v501 = vmul.f32 %v496, %v499
      %v502 = vmul.f32 %v497, %v499
      %v504 = vperm.slane %v445, 0
      %v506 = vadd.f32 %v501, %v504
      %v507 = vadd.f32 %v502, %v504
      %v508 = vld [vmem:[%s3] sm:$0xff]
      %v509 = vld [vmem:[%s3 + $0x8] sm:$0xff]
      %v510 = vld [vmem:[%s3 + $0x10] sm:$0xff]
      %v511 = vld [vmem:[%s3 + $0x18] sm:$0xff]
      %v512 = vld [vmem:[%s3 + $0x20] sm:$0xff]
      %v513 = vld [vmem:[%s3 + $0x28] sm:$0xff]
      %v514 = vld [vmem:[%s3 + $0x30] sm:$0xff]
      %v515 = vld [vmem:[%s3 + $0x38] sm:$0xff]
      %v516 = vld [vmem:[%s3 + $0x40] sm:$0xff]
      %v517 = vld [vmem:[%s3 + $0x48] sm:$0xff]
      %v518 = vld [vmem:[%s3 + $0x50] sm:$0xff]
      %v519 = vld [vmem:[%s3 + $0x58] sm:$0xff]
      %v520 = vld [vmem:[%s3 + $0x60] sm:$0xff]
      %v521 = vld [vmem:[%s3 + $0x68] sm:$0xff]
      %v522 = vld [vmem:[%s3 + $0x70] sm:$0xff]
      %v523 = vld [vmem:[%s3 + $0x78] sm:$0xff]
      %v524 = vpack.c.bf16 %v507, %v506
      %v525 = vpack.c.bf16 %v510, %v508
      %v526 = vpack.c.bf16 %v511, %v509
      %v527 = vpack.c.bf16 %v514, %v512
      %v528 = vpack.c.bf16 %v515, %v513
      %v529 = vpack.c.bf16 %v518, %v516
      %v530 = vpack.c.bf16 %v519, %v517
      %v531 = vpack.c.bf16 %v522, %v520
      %v532 = vpack.c.bf16 %v523, %v521
      %v533 = vld [vmem:[%s4] sm:$0x3]
      %v535 = vperm.slane %v533, 0
      %v536 = vperm.slane %v533, 1
      %v540 = vsel %vm446, %v524, 0
      %542 = vmatpush.bf16.msra.mxu0 0
      %543 = vmatpush.bf16.msra.mxu0 0
      %544 = vmatpush.bf16.msra.mxu0 0
      %545 = vmatpush.bf16.msra.mxu0 0
      %546 = vmatpush.bf16.msra.mxu0 %v531
      %547 = vmatpush.bf16.msra.mxu0 %v529
      %548 = vmatpush.bf16.msra.mxu0 %v527
      %549 = vmatpush.bf16.msra.mxu0 %v525
      %550 = vmatmul.bf16.gmra.mxu0 %v540
      %v551 = vpop.f32.mrf.mxu0
      %v552 = vadd.f32 %v535, %v551
      %v553 = vpop.f32.mrf.mxu0
      %v554 = vadd.f32 %v535, %v553
      %555 = vdwg.mxu0
      %556 = vmatpush.bf16.msra.mxu0 0
      %557 = vmatpush.bf16.msra.mxu0 0
      %558 = vmatpush.bf16.msra.mxu0 0
      %559 = vmatpush.bf16.msra.mxu0 0
      %560 = vmatpush.bf16.msra.mxu0 %v532
      %561 = vmatpush.bf16.msra.mxu0 %v530
      %562 = vmatpush.bf16.msra.mxu0 %v528
      %563 = vmatpush.bf16.msra.mxu0 %v526
      %564 = vmatmul.bf16.gmra.mxu0 %v540
      %v565 = vpop.f32.mrf.mxu0
      %v566 = vadd.f32 %v536, %v565
      %v567 = vpop.f32.mrf.mxu0
      %v568 = vadd.f32 %v536, %v567
      %569 = vdwg.mxu0
      %v570 = vlaneseq
      %v571 = vshrl.u32 %v570, 7
      %v572 = vadd.s32 %v571, 8
      %v573 = vlaneseq
      %v574 = vand.u32 %v573, 127
      %vm575 = vcmp.le.s32.totalorder %v574, %v571
      %vm576 = vcmp.le.s32.totalorder %v574, %v572
      %v577 = vpack.c.bf16 %v554, %v552
      %579 = vrot.lane.b32.xlu0 %v577, 64
      %v580 = vpop.permute.xlu0 %579
      %vm581 = vcmask 130048
      %v583 = vsel %vm581, %v577, 0
      %v586 = vsel %vm581, %v580, 0
      %588 = vmatpush.bf16.xpose.msra.mxu0 0
      %589 = vmatpush.bf16.xpose.msra.mxu0 0
      %590 = vmatpush.bf16.xpose.msra.mxu0 0
      %591 = vmatpush.bf16.xpose.msra.mxu0 0
      %592 = vmatpush.bf16.xpose.msra.mxu0 0
      %593 = vmatpush.bf16.xpose.msra.mxu0 0
      %594 = vmatpush.bf16.xpose.msra.mxu0 0
      %595 = vmatpush.bf16.xpose.msra.mxu0 %v586
      %596 = vmatmul.bf16.gmra.mxu0 %v583
      %v597 = vpop.f32.mrf.mxu0
      %v598 = vadd.f32 0.0, %v597
      %v599 = vpop.f32.mrf.mxu0
      %v600 = vadd.f32 0.0, %v599
      %601 = vdwg.mxu0
      %v602 = vmul.f32 %v598, 0.25
      %v603 = vmul.f32 %v600, 0.25
      %v604 = vsel %vm575, %v602, -1e+30
      %v605 = vsel %vm576, %v603, -1e+30
      %v606 = vsel %vm581, %v604, -inf
      %607 = vmax.xlane.f32.xlu0 %v606
      %v608 = vpop.xlane.xlu0 %607
      %v609 = vsel %vm581, %v605, -inf
      %610 = vmax.xlane.f32.xlu0 %v609
      %v611 = vpop.xlane.xlu0 %610
      %v612 = vsub.f32 %v604, %v608
      %v613 = vsub.f32 %v605, %v611
      %v614 = vmul.f32 %v612, 1.442695
      %v615 = vpow.pop %v614
      %v616 = vmul.f32 %v613, 1.442695
      %v617 = vpow.pop %v616
      %v618 = vsel %vm581, %v615, 0.0
      %619 = vadd.xlane.f32.xlu0 %v618
      %v620 = vpop.xlane.xlu0 %619
      %v621 = vsel %vm581, %v617, 0.0
      %622 = vadd.xlane.f32.xlu0 %v621
      %v623 = vpop.xlane.xlu0 %622
      %v624 = vrcp.pop %v620
      %v625 = vrcp.pop %v623
      %v626 = vmul.f32 %v615, %v624
      %v627 = vmul.f32 %v617, %v625
      %v628 = vpack.c.bf16 %v627, %v626
      %v629 = vpack.c.bf16 %v568, %v566
      %v631 = vsel %vm581, %v628, 0
      %633 = vmatpush.bf16.msra.mxu0 0
      %634 = vmatpush.bf16.msra.mxu0 0
      %635 = vmatpush.bf16.msra.mxu0 0
      %636 = vmatpush.bf16.msra.mxu0 0
      %637 = vmatpush.bf16.msra.mxu0 0
      %638 = vmatpush.bf16.msra.mxu0 0
      %639 = vmatpush.bf16.msra.mxu0 0
      %640 = vmatpush.bf16.msra.mxu0 %v629
      %641 = vmatmul.bf16.gmra.mxu0 %v631
      %v642 = vpop.f32.mrf.mxu0
      %v643 = vadd.f32 0.0, %v642
      %v644 = vpop.f32.mrf.mxu0
      %v645 = vadd.f32 0.0, %v644
      %646 = vdwg.mxu0
      %647 = vrot.lane.b32.xlu0 %v577, 112
      %v648 = vpop.permute.xlu0 %647
      %649 = vrot.lane.b32.xlu0 %v577, 48
      %v650 = vpop.permute.xlu0 %649
      %v652 = vsel %vm581, %v648, 0
      %v655 = vsel %vm581, %v650, 0
      %657 = vmatpush.bf16.xpose.msra.mxu0 0
      %658 = vmatpush.bf16.xpose.msra.mxu0 0
      %659 = vmatpush.bf16.xpose.msra.mxu0 0
      %660 = vmatpush.bf16.xpose.msra.mxu0 0
      %661 = vmatpush.bf16.xpose.msra.mxu0 0
      %662 = vmatpush.bf16.xpose.msra.mxu0 0
      %663 = vmatpush.bf16.xpose.msra.mxu0 0
      %664 = vmatpush.bf16.xpose.msra.mxu0 %v655
      %665 = vmatmul.bf16.gmra.mxu0 %v652
      %v666 = vpop.f32.mrf.mxu0
      %v667 = vadd.f32 0.0, %v666
      %v668 = vpop.f32.mrf.mxu0
      %v669 = vadd.f32 0.0, %v668
      %670 = vdwg.mxu0
      %v671 = vmul.f32 %v667, 0.25
      %v672 = vmul.f32 %v669, 0.25
      %v673 = vsel %vm575, %v671, -1e+30
      %v674 = vsel %vm576, %v672, -1e+30
      %v675 = vsel %vm581, %v673, -inf
      %676 = vmax.xlane.f32.xlu0 %v675
      %v677 = vpop.xlane.xlu0 %676
      %v678 = vsel %vm581, %v674, -inf
      %679 = vmax.xlane.f32.xlu0 %v678
      %v680 = vpop.xlane.xlu0 %679
      %v681 = vsub.f32 %v673, %v677
      %v682 = vsub.f32 %v674, %v680
      %v683 = vmul.f32 %v681, 1.442695
      %v684 = vpow.pop %v683
      %v685 = vmul.f32 %v682, 1.442695
      %v686 = vpow.pop %v685
      %v687 = vsel %vm581, %v684, 0.0
      %688 = vadd.xlane.f32.xlu0 %v687
      %v689 = vpop.xlane.xlu0 %688
      %v690 = vsel %vm581, %v686, 0.0
      %691 = vadd.xlane.f32.xlu0 %v690
      %v692 = vpop.xlane.xlu0 %691
      %v693 = vrcp.pop %v689
      %v694 = vrcp.pop %v692
      %v695 = vmul.f32 %v684, %v693
      %v696 = vmul.f32 %v686, %v694
      %v697 = vpack.c.bf16 %v696, %v695
      %699 = vrot.lane.b32.xlu0 %v629, 112
      %v700 = vpop.permute.xlu0 %699
      %v703 = vsel %vm581, %v697, 0
      %705 = vmatpush.bf16.msra.mxu0 0
      %706 = vmatpush.bf16.msra.mxu0 0
      %707 = vmatpush.bf16.msra.mxu0 0
      %708 = vmatpush.bf16.msra.mxu0 0
      %709 = vmatpush.bf16.msra.mxu0 0
      %710 = vmatpush.bf16.msra.mxu0 0
      %711 = vmatpush.bf16.msra.mxu0 0
      %712 = vmatpush.bf16.msra.mxu0 %v700
      %713 = vmatmul.bf16.gmra.mxu0 %v703
      %v714 = vpop.f32.mrf.mxu0
      %v715 = vadd.f32 0.0, %v714
      %v716 = vpop.f32.mrf.mxu0
      %v717 = vadd.f32 0.0, %v716
      %718 = vdwg.mxu0
      %719 = vrot.lane.b32.xlu0 %v577, 96
      %v720 = vpop.permute.xlu0 %719
      %721 = vrot.lane.b32.xlu0 %v577, 32
      %v722 = vpop.permute.xlu0 %721
      %v724 = vsel %vm581, %v720, 0
      %v727 = vsel %vm581, %v722, 0
      %729 = vmatpush.bf16.xpose.msra.mxu0 0
      %730 = vmatpush.bf16.xpose.msra.mxu0 0
      %731 = vmatpush.bf16.xpose.msra.mxu0 0
      %732 = vmatpush.bf16.xpose.msra.mxu0 0
      %733 = vmatpush.bf16.xpose.msra.mxu0 0
      %734 = vmatpush.bf16.xpose.msra.mxu0 0
      %735 = vmatpush.bf16.xpose.msra.mxu0 0
      %736 = vmatpush.bf16.xpose.msra.mxu0 %v727
      %737 = vmatmul.bf16.gmra.mxu0 %v724
      %v738 = vpop.f32.mrf.mxu0
      %v739 = vadd.f32 0.0, %v738
      %v740 = vpop.f32.mrf.mxu0
      %v741 = vadd.f32 0.0, %v740
      %742 = vdwg.mxu0
      %v743 = vmul.f32 %v739, 0.25
      %v744 = vmul.f32 %v741, 0.25
      %v745 = vsel %vm575, %v743, -1e+30
      %v746 = vsel %vm576, %v744, -1e+30
      %v747 = vsel %vm581, %v745, -inf
      %748 = vmax.xlane.f32.xlu0 %v747
      %v749 = vpop.xlane.xlu0 %748
      %v750 = vsel %vm581, %v746, -inf
      %751 = vmax.xlane.f32.xlu0 %v750
      %v752 = vpop.xlane.xlu0 %751
      %v753 = vsub.f32 %v745, %v749
      %v754 = vsub.f32 %v746, %v752
      %v755 = vmul.f32 %v753, 1.442695
      %v756 = vpow.pop %v755
      %v757 = vmul.f32 %v754, 1.442695
      %v758 = vpow.pop %v757
      %v759 = vsel %vm581, %v756, 0.0
      %760 = vadd.xlane.f32.xlu0 %v759
      %v761 = vpop.xlane.xlu0 %760
      %v762 = vsel %vm581, %v758, 0.0
      %763 = vadd.xlane.f32.xlu0 %v762
      %v764 = vpop.xlane.xlu0 %763
      %v765 = vrcp.pop %v761
      %v766 = vrcp.pop %v764
      %v767 = vmul.f32 %v756, %v765
      %v768 = vmul.f32 %v758, %v766
      %v769 = vpack.c.bf16 %v768, %v767
      %770 = vrot.lane.b32.xlu0 %v629, 96
      %v771 = vpop.permute.xlu0 %770
      %v774 = vsel %vm581, %v769, 0
      %776 = vmatpush.bf16.msra.mxu0 0
      %777 = vmatpush.bf16.msra.mxu0 0
      %778 = vmatpush.bf16.msra.mxu0 0
      %779 = vmatpush.bf16.msra.mxu0 0
      %780 = vmatpush.bf16.msra.mxu0 0
      %781 = vmatpush.bf16.msra.mxu0 0
      %782 = vmatpush.bf16.msra.mxu0 0
      %783 = vmatpush.bf16.msra.mxu0 %v771
      %784 = vmatmul.bf16.gmra.mxu0 %v774
      %v785 = vpop.f32.mrf.mxu0
      %v786 = vadd.f32 0.0, %v785
      %v787 = vpop.f32.mrf.mxu0
      %v788 = vadd.f32 0.0, %v787
      %789 = vdwg.mxu0
      %790 = vrot.lane.b32.xlu0 %v577, 80
      %v791 = vpop.permute.xlu0 %790
      %792 = vrot.lane.b32.xlu0 %v577, 16
      %v793 = vpop.permute.xlu0 %792
      %v795 = vsel %vm581, %v791, 0
      %v798 = vsel %vm581, %v793, 0
      %800 = vmatpush.bf16.xpose.msra.mxu0 0
      %801 = vmatpush.bf16.xpose.msra.mxu0 0
      %802 = vmatpush.bf16.xpose.msra.mxu0 0
      %803 = vmatpush.bf16.xpose.msra.mxu0 0
      %804 = vmatpush.bf16.xpose.msra.mxu0 0
      %805 = vmatpush.bf16.xpose.msra.mxu0 0
      %806 = vmatpush.bf16.xpose.msra.mxu0 0
      %807 = vmatpush.bf16.xpose.msra.mxu0 %v798
      %808 = vmatmul.bf16.gmra.mxu0 %v795
      %v809 = vpop.f32.mrf.mxu0
      %v810 = vadd.f32 0.0, %v809
      %v811 = vpop.f32.mrf.mxu0
      %v812 = vadd.f32 0.0, %v811
      %813 = vdwg.mxu0
      %v814 = vmul.f32 %v810, 0.25
      %v815 = vmul.f32 %v812, 0.25
      %v816 = vsel %vm575, %v814, -1e+30
      %v817 = vsel %vm576, %v815, -1e+30
      %v818 = vsel %vm581, %v816, -inf
      %819 = vmax.xlane.f32.xlu0 %v818
      %v820 = vpop.xlane.xlu0 %819
      %v821 = vsel %vm581, %v817, -inf
      %822 = vmax.xlane.f32.xlu0 %v821
      %v823 = vpop.xlane.xlu0 %822
      %v824 = vsub.f32 %v816, %v820
      %v825 = vsub.f32 %v817, %v823
      %v826 = vmul.f32 %v824, 1.442695
      %v827 = vpow.pop %v826
      %v828 = vmul.f32 %v825, 1.442695
      %v829 = vpow.pop %v828
      %v830 = vsel %vm581, %v827, 0.0
      %831 = vadd.xlane.f32.xlu0 %v830
      %v832 = vpop.xlane.xlu0 %831
      %v833 = vsel %vm581, %v829, 0.0
      %834 = vadd.xlane.f32.xlu0 %v833
      %v835 = vpop.xlane.xlu0 %834
      %v836 = vrcp.pop %v832
      %v837 = vrcp.pop %v835
      %v838 = vmul.f32 %v827, %v836
      %v839 = vmul.f32 %v829, %v837
      %v840 = vpack.c.bf16 %v839, %v838
      %841 = vrot.lane.b32.xlu0 %v629, 80
      %v842 = vpop.permute.xlu0 %841
      %v845 = vsel %vm581, %v840, 0
      %847 = vmatpush.bf16.msra.mxu0 0
      %848 = vmatpush.bf16.msra.mxu0 0
      %849 = vmatpush.bf16.msra.mxu0 0
      %850 = vmatpush.bf16.msra.mxu0 0
      %851 = vmatpush.bf16.msra.mxu0 0
      %852 = vmatpush.bf16.msra.mxu0 0
      %853 = vmatpush.bf16.msra.mxu0 0
      %854 = vmatpush.bf16.msra.mxu0 %v842
      %855 = vmatmul.bf16.gmra.mxu0 %v845
      %v856 = vpop.f32.mrf.mxu0
      %v857 = vadd.f32 0.0, %v856
      %v858 = vpop.f32.mrf.mxu0
      %v859 = vadd.f32 0.0, %v858
      %860 = vdwg.mxu0
      %863 = vrot.lane.b32.xlu0 %v715, 16
      %v864 = vpop.permute.xlu0 %863
      %865 = vrot.lane.b32.xlu0 %v717, 16
      %v866 = vpop.permute.xlu0 %865
      %871 = vrot.lane.b32.xlu0 %v786, 32
      %v872 = vpop.permute.xlu0 %871
      %873 = vrot.lane.b32.xlu0 %v788, 32
      %v874 = vpop.permute.xlu0 %873
      %879 = vrot.lane.b32.xlu0 %v857, 48
      %v880 = vpop.permute.xlu0 %879
      %881 = vrot.lane.b32.xlu0 %v859, 48
      %v882 = vpop.permute.xlu0 %881
      %v885 = vsel %vm581, %v643, %v864
      %v886 = vsel %vm581, %v645, %v866
      %vm887 = vcmask 261120
      %v888 = vsel %vm887, %v885, %v872
      %v889 = vsel %vm887, %v886, %v874
      %vm890 = vcmask 392192
      %v891 = vsel %vm890, %v888, %v880
      %v892 = vsel %vm890, %v889, %v882
      %v893 = vld [vmem:[%s5] sm:$0xff]
      %v894 = vld [vmem:[%s5 + $0x8] sm:$0xff]
      %v895 = vld [vmem:[%s5 + $0x10] sm:$0xff]
      %v896 = vld [vmem:[%s5 + $0x18] sm:$0xff]
      %v897 = vld [vmem:[%s5 + $0x20] sm:$0xff]
      %v898 = vld [vmem:[%s5 + $0x28] sm:$0xff]
      %v899 = vld [vmem:[%s5 + $0x30] sm:$0xff]
      %v900 = vld [vmem:[%s5 + $0x38] sm:$0xff]
      %v901 = vpack.c.bf16 %v892, %v891
      %v902 = vpack.c.bf16 %v894, %v893
      %v903 = vpack.c.bf16 %v896, %v895
      %v904 = vpack.c.bf16 %v898, %v897
      %v905 = vpack.c.bf16 %v900, %v899
      %v907 = vsel %vm446, %v901, 0
      %909 = vmatpush.bf16.msra.mxu0 0
      %910 = vmatpush.bf16.msra.mxu0 0
      %911 = vmatpush.bf16.msra.mxu0 0
      %912 = vmatpush.bf16.msra.mxu0 0
      %913 = vmatpush.bf16.msra.mxu0 %v905
      %914 = vmatpush.bf16.msra.mxu0 %v904
      %915 = vmatpush.bf16.msra.mxu0 %v903
      %916 = vmatpush.bf16.msra.mxu0 %v902
      %917 = vmatmul.bf16.gmra.mxu0 %v907
      %v918 = vpop.f32.mrf.mxu0
      %v919 = vadd.f32 0.0, %v918
      %v920 = vpop.f32.mrf.mxu0
      %v921 = vadd.f32 0.0, %v920
      %922 = vdwg.mxu0
      %v923 = vadd.f32 %v442, %v919
      %v924 = vadd.f32 %v443, %v921
      %v925 = vld [vmem:[%s6] sm:$0x1]
      %v927 = vperm.slane %v925, 0
      %v929 = vadd.f32 %v923, %v927
      %v930 = vadd.f32 %v924, %v927
      %v931 = vld [vmem:[%s7] sm:$0x1]
      %v932 = vld [vmem:[%s8] sm:$0x1]
      %v933 = vsel %vm446, %v929, 0.0
      %934 = vadd.xlane.f32.xlu0 %v933
      %v935 = vpop.xlane.xlu0 %934
      %v936 = vsel %vm446, %v930, 0.0
      %937 = vadd.xlane.f32.xlu0 %v936
      %v938 = vpop.xlane.xlu0 %937
      %v939 = vmul.f32 %v935, %v459
      %v940 = vmul.f32 %v938, %v459
      %v941 = vsub.f32 %v929, %v939
      %v942 = vsub.f32 %v930, %v940
      %v943 = vmul.f32 %v941, %v941
      %v944 = vmul.f32 %v942, %v942
      %v945 = vsel %vm446, %v943, 0.0
      %946 = vadd.xlane.f32.xlu0 %v945
      %v947 = vpop.xlane.xlu0 %946
      %v948 = vsel %vm446, %v944, 0.0
      %949 = vadd.xlane.f32.xlu0 %v948
      %v950 = vpop.xlane.xlu0 %949
      %v951 = vmul.f32 %v947, %v459
      %v952 = vmul.f32 %v950, %v459
      %v953 = vadd.f32 %v951, 1e-05
      %v954 = vadd.f32 %v952, 1e-05
      %v955 = vrsqrt.pop %v953
      %v956 = vmul.f32 %v955, %v953
      %v957 = vmul.f32 %v956, %v955
      %v958 = vmul.f32 0.5, %v957
      %v959 = vsub.f32 1.5, %v958
      %v960 = vmul.f32 %v955, %v959
      %vm961 = vweird.f32 %v953
      %vm962 = vweird.f32 %v955
      %vm963 = vmor %vm961, %vm962
      %v964 = vsel %vm963, %v955, %v960
      %v965 = vrsqrt.pop %v954
      %v966 = vmul.f32 %v965, %v954
      %v967 = vmul.f32 %v966, %v965
      %v968 = vmul.f32 0.5, %v967
      %v969 = vsub.f32 1.5, %v968
      %v970 = vmul.f32 %v965, %v969
      %vm971 = vweird.f32 %v954
      %vm972 = vweird.f32 %v965
      %vm973 = vmor %vm971, %vm972
      %v974 = vsel %vm973, %v965, %v970
      %v975 = vmul.f32 %v941, %v964
      %v976 = vmul.f32 %v942, %v974
      %v978 = vperm.slane %v931, 0
      %v980 = vmul.f32 %v975, %v978
      %v981 = vmul.f32 %v976, %v978
      %v983 = vperm.slane %v932, 0
      %v985 = vadd.f32 %v980, %v983
      %v986 = vadd.f32 %v981, %v983
      %v987 = vld [vmem:[%s9] sm:$0xff]
      %v988 = vld [vmem:[%s9 + $0x8] sm:$0xff]
      %v989 = vld [vmem:[%s9 + $0x10] sm:$0xff]
      %v990 = vld [vmem:[%s9 + $0x18] sm:$0xff]
      %v991 = vld [vmem:[%s9 + $0x20] sm:$0xff]
      %v992 = vld [vmem:[%s9 + $0x28] sm:$0xff]
      %v993 = vld [vmem:[%s9 + $0x30] sm:$0xff]
      %v994 = vld [vmem:[%s9 + $0x38] sm:$0xff]
      %v995 = vld [vmem:[%s9 + $0x40] sm:$0xff]
      %v996 = vld [vmem:[%s9 + $0x48] sm:$0xff]
      %v997 = vld [vmem:[%s9 + $0x50] sm:$0xff]
      %v998 = vld [vmem:[%s9 + $0x58] sm:$0xff]
      %v999 = vld [vmem:[%s9 + $0x60] sm:$0xff]
      %v1000 = vld [vmem:[%s9 + $0x68] sm:$0xff]
      %v1001 = vld [vmem:[%s9 + $0x70] sm:$0xff]
      %v1002 = vld [vmem:[%s9 + $0x78] sm:$0xff]
      %v1003 = vpack.c.bf16 %v986, %v985
      %v1004 = vpack.c.bf16 %v989, %v987
      %v1005 = vpack.c.bf16 %v990, %v988
      %v1006 = vpack.c.bf16 %v993, %v991
      %v1007 = vpack.c.bf16 %v994, %v992
      %v1008 = vpack.c.bf16 %v997, %v995
      %v1009 = vpack.c.bf16 %v998, %v996
      %v1010 = vpack.c.bf16 %v1001, %v999
      %v1011 = vpack.c.bf16 %v1002, %v1000
      %v1012 = vld [vmem:[%s10] sm:$0x3]
      %v1014 = vperm.slane %v1012, 0
      %v1015 = vperm.slane %v1012, 1
      %v1019 = vsel %vm446, %v1003, 0
      %1021 = vmatpush.bf16.msra.mxu0 0
      %1022 = vmatpush.bf16.msra.mxu0 0
      %1023 = vmatpush.bf16.msra.mxu0 0
      %1024 = vmatpush.bf16.msra.mxu0 0
      %1025 = vmatpush.bf16.msra.mxu0 %v1010
      %1026 = vmatpush.bf16.msra.mxu0 %v1008
      %1027 = vmatpush.bf16.msra.mxu0 %v1006
      %1028 = vmatpush.bf16.msra.mxu0 %v1004
      %1029 = vmatmul.bf16.gmra.mxu0 %v1019
      %v1030 = vpop.f32.mrf.mxu0
      %v1031 = vadd.f32 %v1014, %v1030
      %v1032 = vpop.f32.mrf.mxu0
      %v1033 = vadd.f32 %v1014, %v1032
      %1034 = vdwg.mxu0
      %1035 = vmatpush.bf16.msra.mxu0 0
      %1036 = vmatpush.bf16.msra.mxu0 0
      %1037 = vmatpush.bf16.msra.mxu0 0
      %1038 = vmatpush.bf16.msra.mxu0 0
      %1039 = vmatpush.bf16.msra.mxu0 %v1011
      %1040 = vmatpush.bf16.msra.mxu0 %v1009
      %1041 = vmatpush.bf16.msra.mxu0 %v1007
      %1042 = vmatpush.bf16.msra.mxu0 %v1005
      %1043 = vmatmul.bf16.gmra.mxu0 %v1019
      %v1044 = vpop.f32.mrf.mxu0
      %v1045 = vadd.f32 %v1015, %v1044
      %v1046 = vpop.f32.mrf.mxu0
      %v1047 = vadd.f32 %v1015, %v1046
      %1048 = vdwg.mxu0
      %v1049 = vmul.f32 %v1031, 0.5
      %v1050 = vmul.f32 %v1045, 0.5
      %v1051 = vmul.f32 %v1033, 0.5
      %v1052 = vmul.f32 %v1047, 0.5
      %v1053 = vmul.f32 %v1031, 0.044715
      %v1054 = vmul.f32 %v1045, 0.044715
      %v1055 = vmul.f32 %v1033, 0.044715
      %v1056 = vmul.f32 %v1047, 0.044715
      %v1057 = vmul.f32 %v1053, %v1031
      %v1058 = vmul.f32 %v1054, %v1045
      %v1059 = vmul.f32 %v1055, %v1033
      %v1060 = vmul.f32 %v1056, %v1047
      %v1061 = vmul.f32 %v1057, %v1031
      %v1062 = vmul.f32 %v1058, %v1045
      %v1063 = vmul.f32 %v1059, %v1033
      %v1064 = vmul.f32 %v1060, %v1047
      %v1065 = vadd.f32 %v1031, %v1061
      %v1066 = vadd.f32 %v1045, %v1062
      %v1067 = vadd.f32 %v1033, %v1063
      %v1068 = vadd.f32 %v1047, %v1064
      %v1069 = vmul.f32 %v1065, 0.7978846
      %v1070 = vmul.f32 %v1066, 0.7978846
      %v1071 = vmul.f32 %v1067, 0.7978846
      %v1072 = vmul.f32 %v1068, 0.7978846
      %v1073 = vtanh.pop %v1069
      %v1074 = vtanh.pop %v1070
      %v1075 = vtanh.pop %v1071
      %v1076 = vtanh.pop %v1072
      %v1077 = vadd.f32 %v1073, 1.0
      %v1078 = vadd.f32 %v1074, 1.0
      %v1079 = vadd.f32 %v1075, 1.0
      %v1080 = vadd.f32 %v1076, 1.0
      %v1081 = vmul.f32 %v1049, %v1077
      %v1082 = vmul.f32 %v1050, %v1078
      %v1083 = vmul.f32 %v1051, %v1079
      %v1084 = vmul.f32 %v1052, %v1080
      %v1085 = vld [vmem:[%s11] sm:$0xff]
      %v1086 = vld [vmem:[%s11 + $0x8] sm:$0xff]
      %v1087 = vld [vmem:[%s11 + $0x10] sm:$0xff]
      %v1088 = vld [vmem:[%s11 + $0x18] sm:$0xff]
      %v1089 = vld [vmem:[%s11 + $0x20] sm:$0xff]
      %v1090 = vld [vmem:[%s11 + $0x28] sm:$0xff]
      %v1091 = vld [vmem:[%s11 + $0x30] sm:$0xff]
      %v1092 = vld [vmem:[%s11 + $0x38] sm:$0xff]
      %v1093 = vld [vmem:[%s11 + $0x40] sm:$0xff]
      %v1094 = vld [vmem:[%s11 + $0x48] sm:$0xff]
      %v1095 = vld [vmem:[%s11 + $0x50] sm:$0xff]
      %v1096 = vld [vmem:[%s11 + $0x58] sm:$0xff]
      %v1097 = vld [vmem:[%s11 + $0x60] sm:$0xff]
      %v1098 = vld [vmem:[%s11 + $0x68] sm:$0xff]
      %v1099 = vld [vmem:[%s11 + $0x70] sm:$0xff]
      %v1100 = vld [vmem:[%s11 + $0x78] sm:$0xff]
      %v1101 = vld [vmem:[%s11 + $0x80] sm:$0xff]
      %v1102 = vld [vmem:[%s11 + $0x88] sm:$0xff]
      %v1103 = vld [vmem:[%s11 + $0x90] sm:$0xff]
      %v1104 = vld [vmem:[%s11 + $0x98] sm:$0xff]
      %v1105 = vld [vmem:[%s11 + $0xa0] sm:$0xff]
      %v1106 = vld [vmem:[%s11 + $0xa8] sm:$0xff]
      %v1107 = vld [vmem:[%s11 + $0xb0] sm:$0xff]
      %v1108 = vld [vmem:[%s11 + $0xb8] sm:$0xff]
      %v1109 = vld [vmem:[%s11 + $0xc0] sm:$0xff]
      %v1110 = vld [vmem:[%s11 + $0xc8] sm:$0xff]
      %v1111 = vld [vmem:[%s11 + $0xd0] sm:$0xff]
      %v1112 = vld [vmem:[%s11 + $0xd8] sm:$0xff]
      %v1113 = vld [vmem:[%s11 + $0xe0] sm:$0xff]
      %v1114 = vld [vmem:[%s11 + $0xe8] sm:$0xff]
      %v1115 = vld [vmem:[%s11 + $0xf0] sm:$0xff]
      %v1116 = vld [vmem:[%s11 + $0xf8] sm:$0xff]
      %v1117 = vpack.c.bf16 %v1083, %v1081
      %v1118 = vpack.c.bf16 %v1084, %v1082
      %v1119 = vpack.c.bf16 %v1086, %v1085
      %v1120 = vpack.c.bf16 %v1088, %v1087
      %v1121 = vpack.c.bf16 %v1090, %v1089
      %v1122 = vpack.c.bf16 %v1092, %v1091
      %v1123 = vpack.c.bf16 %v1094, %v1093
      %v1124 = vpack.c.bf16 %v1096, %v1095
      %v1125 = vpack.c.bf16 %v1098, %v1097
      %v1126 = vpack.c.bf16 %v1100, %v1099
      %v1127 = vpack.c.bf16 %v1102, %v1101
      %v1128 = vpack.c.bf16 %v1104, %v1103
      %v1129 = vpack.c.bf16 %v1106, %v1105
      %v1130 = vpack.c.bf16 %v1108, %v1107
      %v1131 = vpack.c.bf16 %v1110, %v1109
      %v1132 = vpack.c.bf16 %v1112, %v1111
      %v1133 = vpack.c.bf16 %v1114, %v1113
      %v1134 = vpack.c.bf16 %v1116, %v1115
      %1135 = vmatpush.bf16.msra.mxu0 %v1126
      %1136 = vmatpush.bf16.msra.mxu0 %v1125
      %1137 = vmatpush.bf16.msra.mxu0 %v1124
      %1138 = vmatpush.bf16.msra.mxu0 %v1123
      %1139 = vmatpush.bf16.msra.mxu0 %v1122
      %1140 = vmatpush.bf16.msra.mxu0 %v1121
      %1141 = vmatpush.bf16.msra.mxu0 %v1120
      %1142 = vmatpush.bf16.msra.mxu0 %v1119
      %1143 = vmatmul.bf16.gmra.mxu0 %v1117
      %v1144 = vpop.f32.mrf.mxu0
      %v1145 = vadd.f32 0.0, %v1144
      %v1146 = vpop.f32.mrf.mxu0
      %v1147 = vadd.f32 0.0, %v1146
      %1148 = vdwg.mxu0
      %1149 = vmatpush.bf16.msra.mxu0 %v1134
      %1150 = vmatpush.bf16.msra.mxu0 %v1133
      %1151 = vmatpush.bf16.msra.mxu0 %v1132
      %1152 = vmatpush.bf16.msra.mxu0 %v1131
      %1153 = vmatpush.bf16.msra.mxu0 %v1130
      %1154 = vmatpush.bf16.msra.mxu0 %v1129
      %1155 = vmatpush.bf16.msra.mxu0 %v1128
      %1156 = vmatpush.bf16.msra.mxu0 %v1127
      %1157 = vmatmul.bf16.gmra.mxu0 %v1118
      %v1158 = vpop.f32.mrf.mxu0
      %v1159 = vadd.f32 %v1145, %v1158
      %v1160 = vpop.f32.mrf.mxu0
      %v1161 = vadd.f32 %v1147, %v1160
      %1162 = vdwg.mxu0
      %v1163 = vadd.f32 %v929, %v1159
      %v1164 = vadd.f32 %v930, %v1161
      %v1165 = vld [vmem:[%s12] sm:$0x1]
      %v1167 = vperm.slane %v1165, 0
      %v1169 = vadd.f32 %v1163, %v1167
      %v1170 = vadd.f32 %v1164, %v1167
      %1171 = vst.msk [vmem:[%s440] sm:$0xff] %vm446, %v1169
      %1172 = vst.msk [vmem:[%s440 + $0x8] sm:$0xff] %vm446, %v1170
      %p1173 = scmp.lt.s32.totalorder %s24, 1
      %s1174 = scalar_select %p1173, %s24, 1
      %s1175 = smul.addr %s1174, 2
      %s1176 = smul.addr %s1175, 8
      %s1177 = scalar_lea.vmem %s13, %s1176
      // Predicated region
      $region73: #{tamil_gpt_forward.3} parent=71 // pred_check
        %p1178 = pneg %p320
      $region74: #{tamil_gpt_forward.3} parent=71 // pred_check_branch
        %1180 = sbr.rel (%p1178) target = $region76
      $region75: #{tamil_gpt_forward.3} parent=71 // pred_region
        _
      $region76: #{tamil_gpt_forward.3} parent=71 // pred_fallthru
        _
    $region72: #{tamil_gpt_forward.3} parent=5 // pred_fallthru
      _
    %p1181 = scmp.le.s32.totalorder 2, %s19
    // Predicated region
    $region77: #{tamil_gpt_forward.3} parent=5 // pred_check
      %p1182 = pneg %p1181
    $region78: #{tamil_gpt_forward.3} parent=5 // pred_check_branch
      %1184 = sbr.rel (%p1182) target = $region80
    $region79: #{tamil_gpt_forward.3} parent=5 // pred_region
      %s1185 = ssub.s32 %s19, 2
      // Predicated region
      $region81: #{tamil_gpt_forward.3} parent=79 // pred_check
        %p1186 = pneg %p326
      $region82: #{tamil_gpt_forward.3} parent=79 // pred_check_branch
        %1188 = sbr.rel (%p1186) target = $region84
      $region83: #{tamil_gpt_forward.3} parent=79 // pred_region
        %p1189 = scmp.lt.s32.totalorder %s25, 1
        %s1190 = scalar_select %p1189, %s25, 1
        %s1191 = smul.addr %s1190, 2
        %s1192 = smul.addr %s1191, 8
        %s1193 = scalar_lea.vmem %s13, %s1192
      $region84: #{tamil_gpt_forward.3} parent=79 // pred_fallthru
        _
    $region80: #{tamil_gpt_forward.3} parent=5 // pred_fallthru
      _
  $region6: #{tamil_gpt_forward.3} parent=0 // loop_footer
    %s23 = sadd.s32 1, %s19
  $region7: #{tamil_gpt_forward.3} parent=0 // loop_footer_branch
    %18 = sbr.rel target = $region3
  $region8: #{tamil_gpt_forward.3} parent=0 // loop_exit
    _

</llo_original>
